<compile_context>
chip_gen: v7x
topology: tpu7x:2x2x1
jax: 0.10.0
libtpu: 0.0.40
codegen_flags: <defaults>
</compile_context>

<pallas_src>
import functools

import jax
import jax.numpy as jnp
from jax import lax
from jax.experimental import pallas as pl
from jax.experimental.pallas import tpu as pltpu


def _round_up(x, m):
    return ((x + m - 1) // m) * m


def _make_vq_kernel(n_codes, emb_dim, tile_t, t_valid):
    """Builds the per-(batch, time-tile) VQ kernel.

    Block shapes seen by the kernel:
      x_ref:      (D, Tt)  f32  input slab straight from [B, D, T] (no host transpose)
      emb_ref:    (M, D)   bf16 codebook (MXU operand for the distance matmul)
      embt_ref:   (D, M)   f32  transposed codebook (exact gather operand)
      embsq_ref:  (M, 1)   f32  precomputed ||e||^2 (hoisted out of the kernel)
      q_ref:      (D, Tt)  f32  quantized slab, lane-dense store, [B, D, T] layout
      idx_ref:    (1, Tt)  i32  argmin code ids, lane-dense store
      counts_ref: (M, 1)   f32  per-batch code histogram (resident accumulator)
      loss_ref:   (1, Tt)  f32  per-lane partial sum of mse*nonpad (accumulator)
      npad_ref:   (1, Tt)  f32  per-lane partial sum of nonpad     (accumulator)
    """
    inv_d = 1.0 / float(emb_dim)

    def kernel(x_ref, emb_ref, embt_ref, embsq_ref,
               q_ref, idx_ref, counts_ref, loss_ref, npad_ref):
        t = pl.program_id(1)

        # Per-batch accumulators: re-initialise whenever a new batch row starts.
        # (They are indexed by the batch grid axis, so the "parallel" batch axis
        # on a 2-TC chip cannot race on them.)
        @pl.when(t == 0)
        def _():
            counts_ref[...] = jnp.zeros_like(counts_ref)
            loss_ref[...] = jnp.zeros_like(loss_ref)
            npad_ref[...] = jnp.zeros_like(npad_ref)

        x = x_ref[...]                                    # (D, Tt) f32
        x_bf = x.astype(jnp.bfloat16)                     # MXU operand only

        # argmin_m ||x - e_m||^2 == argmin_m (||e_m||^2 - 2 e_m . x)
        xe = jnp.dot(emb_ref[...], x_bf,
                     preferred_element_type=jnp.float32)  # (M, Tt) bf16 MXU
        scores = embsq_ref[...] - 2.0 * xe                # (M, Tt) f32

        # First-minimum argmin over the code (sublane) axis -> torch.argmin tie-break.
        smin = jnp.min(scores, axis=0, keepdims=True)                       # (1, Tt)
        m_iota = lax.broadcasted_iota(jnp.int32, scores.shape, 0)           # (M, Tt)
        idx = jnp.min(
            jnp.where(scores == smin, m_iota.astype(jnp.float32),
                      float(n_codes)),
            axis=0, keepdims=True).astype(jnp.int32)                        # (1, Tt)
        idx_ref[...] = idx

        # Exact codebook gather through the MXU (emb^T @ one-hot), kept in f32.
        onehot = (m_iota == idx).astype(jnp.float32)                        # (M, Tt)
        quant = jnp.dot(embt_ref[...], onehot,
                        preferred_element_type=jnp.float32)                 # (D, Tt)
        q_ref[...] = quant

        # Histogram of code usage; padded time columns (t >= T) are masked out so
        # avg_probs/perplexity use the true B*T rows only.
        t_glob = t * tile_t + lax.broadcasted_iota(jnp.int32, (1, tile_t), 1)
        valid = (t_glob < t_valid).astype(jnp.float32)                      # (1, Tt)
        counts_ref[...] += jnp.sum(onehot * valid, axis=1, keepdims=True)   # (M, 1)

        # Masked commitment-loss partials (per-lane accumulation, reduced on host;
        # elementwise math stays f32 -> no bf16 VPU requirement on v5e).
        diff = x - quant
        mse = jnp.sum(diff * diff, axis=0, keepdims=True) * inv_d           # (1, Tt)
        nonpad = (jnp.sum(jnp.abs(x), axis=0, keepdims=True) > 0.0
                  ).astype(jnp.float32)                                     # (1, Tt)
        loss_ref[...] += mse * nonpad
        npad_ref[...] += nonpad

    return kernel


@functools.partial(jax.jit, static_argnames=("commitment_cost", "tile_t"))
def vq_embedding_ema_forward(x_bdt, embedding, commitment_cost=0.25, tile_t=256):
    """Forward pass of VQEmbeddingEMA (eval mode).

    x_bdt:     [B, D, T] float32 (PyTorch channel-first layout)
    embedding: [M, D]    float32 codebook

    Returns (quantized [B, D, T], loss scalar, indices [B, T] int32, perplexity).
    """
    B, D, T = x_bdt.shape
    M = embedding.shape[0]

    # Time tile: >=128 lanes for dense stores / wide MXU panels, capped near T.
    tile_t_eff = min(int(tile_t), _round_up(T, 128))
    t_pad = _round_up(T, tile_t_eff)
    n_t = t_pad // tile_t_eff

    x_f32 = x_bdt.astype(jnp.float32)
    if t_pad != T:
        x_f32 = jnp.pad(x_f32, ((0, 0), (0, 0), (0, t_pad - T)))

    emb_f32 = embedding.astype(jnp.float32)
    emb_bf = emb_f32.astype(jnp.bfloat16)                       # distance-matmul operand
    emb_t = jnp.transpose(emb_f32)                              # (D, M) exact gather operand
    emb_sq = jnp.sum(emb_f32 * emb_f32, axis=1, keepdims=True)  # (M, 1) hoisted ||e||^2

    kernel = _make_vq_kernel(M, D, tile_t_eff, T)

    q_pad, idx_pad, counts, loss_part, npad_part = pl.pallas_call(
        kernel,
        out_shape=(
            jax.ShapeDtypeStruct((B, D, t_pad), jnp.float32),       # quantized [B, D, T_pad]
            jax.ShapeDtypeStruct((B, 1, t_pad), jnp.int32),         # code indices
            jax.ShapeDtypeStruct((B, M, 1), jnp.float32),           # per-batch histogram
            jax.ShapeDtypeStruct((B, 1, tile_t_eff), jnp.float32),  # per-lane loss partials
            jax.ShapeDtypeStruct((B, 1, tile_t_eff), jnp.float32),  # per-lane nonpad partials
        ),
        grid_spec=pltpu.PrefetchScalarGridSpec(
            num_scalar_prefetch=0,
            grid=(B, n_t),
            in_specs=[
                pl.BlockSpec((None, D, tile_t_eff), lambda b, t: (b, 0, t)),  # x slab
                pl.BlockSpec((M, D), lambda b, t: (0, 0)),                    # emb (bf16)
                pl.BlockSpec((D, M), lambda b, t: (0, 0)),                    # emb^T (f32)
                pl.BlockSpec((M, 1), lambda b, t: (0, 0)),                    # ||e||^2
            ],
            out_specs=[
                pl.BlockSpec((None, D, tile_t_eff), lambda b, t: (b, 0, t)),
                pl.BlockSpec((None, 1, tile_t_eff), lambda b, t: (b, 0, t)),
                pl.BlockSpec((None, M, 1), lambda b, t: (b, 0, 0)),           # accumulator
                pl.BlockSpec((None, 1, tile_t_eff), lambda b, t: (b, 0, 0)),  # accumulator
                pl.BlockSpec((None, 1, tile_t_eff), lambda b, t: (b, 0, 0)),  # accumulator
            ],
        ),
        compiler_params=pltpu.CompilerParams(
            # batch axis is safe to parallelise (per-batch accumulators) -> uses
            # both TensorCores on v7x; time axis carries the accumulation.
            dimension_semantics=("parallel", "arbitrary"),
        ),
    )(x_f32, emb_bf, emb_t, emb_sq)

    quantized = q_pad[:, :, :T]          # straight-through == quantized in value
    indices = idx_pad[:, 0, :T]

    counts_vec = jnp.sum(counts[:, :, 0], axis=0)            # (M,)
    loss_num = jnp.sum(loss_part)
    npad_sum = jnp.sum(npad_part)
    loss = commitment_cost * loss_num / npad_sum

    avg_probs = counts_vec / jnp.float32(B * T)
    perplexity = jnp.exp(-jnp.sum(avg_probs * jnp.log(avg_probs + 1e-10)))

    return quantized, loss, indices, perplexity


def _reference_forward(x_bdt, embedding, commitment_cost=0.25):
    """Pure-JAX f32 reference mirroring the PyTorch forward (eval mode)."""
    B, D, T = x_bdt.shape
    M = embedding.shape[0]
    hp = jax.lax.Precision.HIGHEST
    x = jnp.transpose(x_bdt, (0, 2, 1)).astype(jnp.float32)     # [B, T, D]
    x_flat = x.reshape(-1, D)
    emb = embedding.astype(jnp.float32)
    dist = (jnp.sum(emb ** 2, axis=1)[None, :]
            + jnp.sum(x_flat ** 2, axis=1, keepdims=True)
            - 2.0 * jnp.matmul(x_flat, emb.T, precision=hp))
    indices = jnp.argmin(dist, axis=-1)
    quantized = emb[indices].reshape(B, T, D)
    e_latent = jnp.mean((x - quantized) ** 2, axis=-1)
    nonpad = (jnp.sum(jnp.abs(x), axis=-1) > 0).astype(jnp.float32)
    loss = commitment_cost * jnp.sum(e_latent * nonpad) / jnp.sum(nonpad)
    encod = jax.nn.one_hot(indices, M, dtype=jnp.float32)
    avg_probs = jnp.mean(encod, axis=0)
    perplexity = jnp.exp(-jnp.sum(avg_probs * jnp.log(avg_probs + 1e-10)))
    return (jnp.transpose(quantized, (0, 2, 1)), loss,
            indices.reshape(B, T), perplexity, dist)


if __name__ == "__main__":
    # Small shapes consistent with the module: n_embeddings=128, embedding_dim=32.
    B, D, T, M = 2, 32, 300, 128
    key = jax.random.PRNGKey(0)
    k_x, k_emb = jax.random.split(key)

    # deterministic init: embedding ~ U(-1/512, 1/512), as in __init__
    init_bound = 1.0 / 512
    embedding = jax.random.uniform(
        k_emb, (M, D), minval=-init_bound, maxval=init_bound, dtype=jnp.float32)
    x = jax.random.normal(k_x, (B, D, T), dtype=jnp.float32)
    # a few genuinely silent (all-zero) frames to exercise the non-padding mask
    x = x.at[:, :, 120:128].set(0.0)

    quantized, loss, indices, perplexity = vq_embedding_ema_forward(x, embedding)
    jax.block_until_ready((quantized, loss, indices, perplexity))

    q_ref, loss_ref, idx_ref, perp_ref, dist_f32 = _reference_forward(x, embedding)

    # (1) internal consistency: outputs must agree with a pure-JAX recomputation
    #     driven by the kernel's own code choices.
    idx_k = indices
    q_from_idx = jnp.transpose(embedding[idx_k], (0, 2, 1))        # [B, D, T]
    assert jnp.allclose(quantized, q_from_idx, atol=1e-5), "gather mismatch"

    x_btd = jnp.transpose(x, (0, 2, 1))
    q_btd = embedding[idx_k]
    mse = jnp.mean((x_btd - q_btd) ** 2, axis=-1)
    npd = (jnp.sum(jnp.abs(x_btd), axis=-1) > 0).astype(jnp.float32)
    loss_chk = 0.25 * jnp.sum(mse * npd) / jnp.sum(npd)
    assert jnp.allclose(loss, loss_chk, rtol=1e-4, atol=1e-6), "loss mismatch"

    counts_chk = jnp.zeros((M,), jnp.float32).at[idx_k.reshape(-1)].add(1.0)
    avg_chk = counts_chk / (B * T)
    perp_chk = jnp.exp(-jnp.sum(avg_chk * jnp.log(avg_chk + 1e-10)))
    assert jnp.allclose(perplexity, perp_chk, rtol=1e-4), "perplexity mismatch"

    # (2) chosen codes are (near-)optimal under the exact f32 distance; the bf16
    #     distance matmul may only flip near-ties (margin >> bf16 perturbation).
    chosen = jnp.take_along_axis(dist_f32, idx_k.reshape(-1, 1), axis=1)[:, 0]
    assert bool(jnp.all(chosen <= dist_f32.min(axis=1) + 1e-3)), "argmin not near-optimal"

    # (3) close to the f32 PyTorch-style reference (tolerances account for bf16
    #     near-tie flips with this tiny-spread untrained codebook).
    match = float(jnp.mean((idx_k == idx_ref).astype(jnp.float32)))
    assert match >= 0.95, f"too many index flips vs f32 reference: {match}"
    assert jnp.allclose(quantized, q_ref, atol=5e-3), "quantized mismatch vs reference"
    assert jnp.allclose(loss, loss_ref, rtol=1e-3, atol=1e-4), "loss mismatch vs reference"
    assert jnp.allclose(perplexity, perp_ref, rtol=0.1), "perplexity mismatch vs reference"

    print("KERNEL_OK")
</pallas_src>

<mosaic_0001>
module attributes {stable_mosaic.version = 11 : i64} {
  func.func @kernel(%arg0: i32, %arg1: i32, %arg2: memref<1x32x256xf32, #tpu.memory_space<vmem>>, %arg3: memref<128x32xbf16, #tpu.memory_space<vmem>>, %arg4: memref<32x128xf32, #tpu.memory_space<vmem>>, %arg5: memref<128x1xf32, #tpu.memory_space<vmem>>, %arg6: memref<1x32x256xf32, #tpu.memory_space<vmem>>, %arg7: memref<1x1x256xi32, #tpu.memory_space<vmem>>, %arg8: memref<1x128x1xf32, #tpu.memory_space<vmem>>, %arg9: memref<1x1x256xf32, #tpu.memory_space<vmem>>, %arg10: memref<1x1x256xf32, #tpu.memory_space<vmem>>) attributes {dimension_semantics = [#tpu.dimension_semantics<parallel>, #tpu.dimension_semantics<arbitrary>], iteration_bounds = array<i64: 2, 2>, scalar_prefetch = 0 : i64, scratch_operands = 0 : i64, tpu.core_type = #tpu.core_type<tc>, window_params = [{transform_indices = @transform_0, window_bounds = array<i64: 1, 32, 256>}, {pipeline_mode = #tpu.pipeline_mode<synchronous>, transform_indices = @transform_1, window_bounds = array<i64: 128, 32>}, {pipeline_mode = #tpu.pipeline_mode<synchronous>, transform_indices = @transform_2, window_bounds = array<i64: 32, 128>}, {pipeline_mode = #tpu.pipeline_mode<synchronous>, transform_indices = @transform_3, window_bounds = array<i64: 128, 1>}, {transform_indices = @transform_4, window_bounds = array<i64: 1, 32, 256>}, {transform_indices = @transform_5, window_bounds = array<i64: 1, 1, 256>}, {transform_indices = @transform_6, window_bounds = array<i64: 1, 128, 1>}, {transform_indices = @transform_7, window_bounds = array<i64: 1, 1, 256>}, {transform_indices = @transform_8, window_bounds = array<i64: 1, 1, 256>}]} {
    %c0_i32 = arith.constant 0 : i32
    %0 = arith.cmpi eq, %arg1, %c0_i32 : i32
    %1 = arith.extui %0 : i1 to i32
    %c0_i32_0 = arith.constant 0 : i32
    %2 = arith.cmpi ne, %1, %c0_i32_0 : i32
    scf.if %2 {
      %cst_43 = arith.constant 0.000000e+00 : f32
      %80 = vector.broadcast %cst_43 : f32 to vector<128x1xf32>
      %c0_44 = arith.constant 0 : index
      %c0_45 = arith.constant 0 : index
      %c0_46 = arith.constant 0 : index
      %81 = vector.load %arg8[%c0_44, %c0_45, %c0_46] : memref<1x128x1xf32, #tpu.memory_space<vmem>>, vector<1x128x1xf32>
      %82 = vector.shape_cast %81 : vector<1x128x1xf32> to vector<128x1xf32>
      %83 = vector.shape_cast %80 : vector<128x1xf32> to vector<1x128x1xf32>
      tpu.vector_store %arg8[%c0_44, %c0_45, %c0_46], %83 {strides = array<i32>} : memref<1x128x1xf32, #tpu.memory_space<vmem>>, vector<1x128x1xf32>,
      %cst_47 = arith.constant 0.000000e+00 : f32
      %84 = vector.broadcast %cst_47 : f32 to vector<1x256xf32>
      %c0_48 = arith.constant 0 : index
      %c0_49 = arith.constant 0 : index
      %c0_50 = arith.constant 0 : index
      %85 = vector.load %arg9[%c0_48, %c0_49, %c0_50] : memref<1x1x256xf32, #tpu.memory_space<vmem>>, vector<1x1x256xf32>
      %86 = vector.shape_cast %85 : vector<1x1x256xf32> to vector<1x256xf32>
      %87 = vector.shape_cast %84 : vector<1x256xf32> to vector<1x1x256xf32>
      tpu.vector_store %arg9[%c0_48, %c0_49, %c0_50], %87 {strides = array<i32>} : memref<1x1x256xf32, #tpu.memory_space<vmem>>, vector<1x1x256xf32>,
      %cst_51 = arith.constant 0.000000e+00 : f32
      %88 = vector.broadcast %cst_51 : f32 to vector<1x256xf32>
      %c0_52 = arith.constant 0 : index
      %c0_53 = arith.constant 0 : index
      %c0_54 = arith.constant 0 : index
      %89 = vector.load %arg10[%c0_52, %c0_53, %c0_54] : memref<1x1x256xf32, #tpu.memory_space<vmem>>, vector<1x1x256xf32>
      %90 = vector.shape_cast %89 : vector<1x1x256xf32> to vector<1x256xf32>
      %91 = vector.shape_cast %88 : vector<1x256xf32> to vector<1x1x256xf32>
      tpu.vector_store %arg10[%c0_52, %c0_53, %c0_54], %91 {strides = array<i32>} : memref<1x1x256xf32, #tpu.memory_space<vmem>>, vector<1x1x256xf32>,
    } else {
    }
    %c0 = arith.constant 0 : index
    %c0_1 = arith.constant 0 : index
    %c0_2 = arith.constant 0 : index
    %3 = vector.load %arg2[%c0, %c0_1, %c0_2] : memref<1x32x256xf32, #tpu.memory_space<vmem>>, vector<1x32x256xf32>
    %4 = vector.shape_cast %3 : vector<1x32x256xf32> to vector<32x256xf32>
    %5 = arith.truncf %4 : vector<32x256xf32> to vector<32x256xbf16>
    %c0_3 = arith.constant 0 : index
    %c0_4 = arith.constant 0 : index
    %6 = vector.load %arg3[%c0_3, %c0_4] : memref<128x32xbf16, #tpu.memory_space<vmem>>, vector<128x32xbf16>
    %cst = arith.constant dense<0.000000e+00> : vector<128x256xf32>
    %7 = tpu.matmul %6, %5, %cst {dimension_numbers = #tpu.dot_dimension_numbers<[1], [0], [0], [1], [0, 0, 1, 1], [], []>} : vector<128x32xbf16>, vector<32x256xbf16>, vector<128x256xf32> -> vector<128x256xf32>
    %c0_5 = arith.constant 0 : index
    %c0_6 = arith.constant 0 : index
    %8 = vector.load %arg5[%c0_5, %c0_6] : memref<128x1xf32, #tpu.memory_space<vmem>>, vector<128x1xf32>
    %cst_7 = arith.constant 2.000000e+00 : f32
    %9 = vector.broadcast %cst_7 : f32 to vector<128x256xf32>
    %10 = arith.mulf %9, %7 : vector<128x256xf32>
    %11 = vector.broadcast %8 : vector<128x1xf32> to vector<128x256xf32>
    %12 = arith.subf %11, %10 : vector<128x256xf32>
    %cst_8 = arith.constant dense<0x7F800000> : vector<256xf32>
    %13 = vector.multi_reduction <minimumf>, %12, %cst_8 [0] : vector<128x256xf32> to vector<256xf32>
    %14 = vector.shape_cast %13 : vector<256xf32> to vector<1x256xf32>
    %15 = tpu.iota {dimensions = array<i32: 0>} : vector<128x256xi32>
    %16 = vector.broadcast %14 : vector<1x256xf32> to vector<128x256xf32>
    %17 = arith.cmpf oeq, %12, %16 : vector<128x256xf32>
    %18 = arith.sitofp %15 : vector<128x256xi32> to vector<128x256xf32>
    %cst_9 = arith.constant 1.280000e+02 : f32
    %19 = vector.broadcast %cst_9 : f32 to vector<128x256xf32>
    %20 = arith.select %17, %18, %19 : vector<128x256xi1>, vector<128x256xf32>
    %cst_10 = arith.constant dense<0x7F800000> : vector<256xf32>
    %21 = vector.multi_reduction <minimumf>, %20, %cst_10 [0] : vector<128x256xf32> to vector<256xf32>
    %22 = vector.shape_cast %21 : vector<256xf32> to vector<1x256xf32>
    %23 = arith.fptosi %22 : vector<1x256xf32> to vector<1x256xi32>
    %c0_11 = arith.constant 0 : index
    %c0_12 = arith.constant 0 : index
    %c0_13 = arith.constant 0 : index
    %24 = vector.load %arg7[%c0_11, %c0_12, %c0_13] : memref<1x1x256xi32, #tpu.memory_space<vmem>>, vector<1x1x256xi32>
    %25 = vector.shape_cast %24 : vector<1x1x256xi32> to vector<1x256xi32>
    %26 = vector.shape_cast %23 : vector<1x256xi32> to vector<1x1x256xi32>
    tpu.vector_store %arg7[%c0_11, %c0_12, %c0_13], %26 {strides = array<i32>} : memref<1x1x256xi32, #tpu.memory_space<vmem>>, vector<1x1x256xi32>,
    %27 = vector.broadcast %23 : vector<1x256xi32> to vector<128x256xi32>
    %28 = arith.cmpi eq, %15, %27 : vector<128x256xi32>
    %29 = arith.extui %28 : vector<128x256xi1> to vector<128x256xi32>
    %30 = arith.sitofp %29 : vector<128x256xi32> to vector<128x256xf32>
    %c0_14 = arith.constant 0 : index
    %c0_15 = arith.constant 0 : index
    %31 = vector.load %arg4[%c0_14, %c0_15] : memref<32x128xf32, #tpu.memory_space<vmem>>, vector<32x128xf32>
    %cst_16 = arith.constant dense<0.000000e+00> : vector<32x256xf32>
    %32 = tpu.matmul %31, %30, %cst_16 {dimension_numbers = #tpu.dot_dimension_numbers<[1], [0], [0], [1], [0, 0, 1, 1], [], []>} : vector<32x128xf32>, vector<128x256xf32>, vector<32x256xf32> -> vector<32x256xf32>
    %c0_17 = arith.constant 0 : index
    %c0_18 = arith.constant 0 : index
    %c0_19 = arith.constant 0 : index
    %33 = vector.load %arg6[%c0_17, %c0_18, %c0_19] : memref<1x32x256xf32, #tpu.memory_space<vmem>>, vector<1x32x256xf32>
    %34 = vector.shape_cast %33 : vector<1x32x256xf32> to vector<32x256xf32>
    %35 = vector.shape_cast %32 : vector<32x256xf32> to vector<1x32x256xf32>
    tpu.vector_store %arg6[%c0_17, %c0_18, %c0_19], %35 {strides = array<i32>} : memref<1x32x256xf32, #tpu.memory_space<vmem>>, vector<1x32x256xf32>,
    %c256_i32 = arith.constant 256 : i32
    %36 = arith.muli %arg1, %c256_i32 : i32
    %37 = tpu.iota {dimensions = array<i32: 1>} : vector<1x256xi32>
    %38 = vector.broadcast %36 : i32 to vector<1x256xi32>
    %39 = arith.addi %38, %37 : vector<1x256xi32>
    %c300_i32 = arith.constant 300 : i32
    %40 = vector.broadcast %c300_i32 : i32 to vector<1x256xi32>
    %41 = arith.cmpi slt, %39, %40 : vector<1x256xi32>
    %42 = arith.extui %41 : vector<1x256xi1> to vector<1x256xi32>
    %43 = arith.sitofp %42 : vector<1x256xi32> to vector<1x256xf32>
    %c0_20 = arith.constant 0 : index
    %c0_21 = arith.constant 0 : index
    %c0_22 = arith.constant 0 : index
    %44 = vector.load %arg8[%c0_20, %c0_21, %c0_22] : memref<1x128x1xf32, #tpu.memory_space<vmem>>, vector<1x128x1xf32>
    %45 = vector.shape_cast %44 : vector<1x128x1xf32> to vector<128x1xf32>
    %46 = vector.broadcast %43 : vector<1x256xf32> to vector<128x256xf32>
    %47 = arith.mulf %30, %46 : vector<128x256xf32>
    %cst_23 = arith.constant dense<0.000000e+00> : vector<128xf32>
    %48 = vector.multi_reduction <add>, %47, %cst_23 [1] : vector<128x256xf32> to vector<128xf32>
    %49 = vector.shape_cast %48 : vector<128xf32> to vector<128x1xf32>
    %50 = arith.addf %45, %49 : vector<128x1xf32>
    %c0_24 = arith.constant 0 : index
    %c0_25 = arith.constant 0 : index
    %c0_26 = arith.constant 0 : index
    %51 = vector.load %arg8[%c0_24, %c0_25, %c0_26] : memref<1x128x1xf32, #tpu.memory_space<vmem>>, vector<1x128x1xf32>
    %52 = vector.shape_cast %51 : vector<1x128x1xf32> to vector<128x1xf32>
    %53 = vector.shape_cast %50 : vector<128x1xf32> to vector<1x128x1xf32>
    tpu.vector_store %arg8[%c0_24, %c0_25, %c0_26], %53 {strides = array<i32>} : memref<1x128x1xf32, #tpu.memory_space<vmem>>, vector<1x128x1xf32>,
    %54 = arith.subf %4, %32 : vector<32x256xf32>
    %55 = arith.mulf %54, %54 : vector<32x256xf32>
    %cst_27 = arith.constant dense<0.000000e+00> : vector<256xf32>
    %56 = vector.multi_reduction <add>, %55, %cst_27 [0] : vector<32x256xf32> to vector<256xf32>
    %57 = vector.shape_cast %56 : vector<256xf32> to vector<1x256xf32>
    %cst_28 = arith.constant 3.125000e-02 : f32
    %58 = vector.broadcast %cst_28 : f32 to vector<1x256xf32>
    %59 = arith.mulf %57, %58 : vector<1x256xf32>
    %60 = math.absf %4 : vector<32x256xf32>
    %cst_29 = arith.constant dense<0.000000e+00> : vector<256xf32>
    %61 = vector.multi_reduction <add>, %60, %cst_29 [0] : vector<32x256xf32> to vector<256xf32>
    %62 = vector.shape_cast %61 : vector<256xf32> to vector<1x256xf32>
    %cst_30 = arith.constant 0.000000e+00 : f32
    %63 = vector.broadcast %cst_30 : f32 to vector<1x256xf32>
    %64 = arith.cmpf ogt, %62, %63 : vector<1x256xf32>
    %65 = arith.extui %64 : vector<1x256xi1> to vector<1x256xi32>
    %66 = arith.sitofp %65 : vector<1x256xi32> to vector<1x256xf32>
    %c0_31 = arith.constant 0 : index
    %c0_32 = arith.constant 0 : index
    %c0_33 = arith.constant 0 : index
    %67 = vector.load %arg9[%c0_31, %c0_32, %c0_33] : memref<1x1x256xf32, #tpu.memory_space<vmem>>, vector<1x1x256xf32>
    %68 = vector.shape_cast %67 : vector<1x1x256xf32> to vector<1x256xf32>
    %69 = arith.mulf %59, %66 : vector<1x256xf32>
    %70 = arith.addf %68, %69 : vector<1x256xf32>
    %c0_34 = arith.constant 0 : index
    %c0_35 = arith.constant 0 : index
    %c0_36 = arith.constant 0 : index
    %71 = vector.load %arg9[%c0_34, %c0_35, %c0_36] : memref<1x1x256xf32, #tpu.memory_space<vmem>>, vector<1x1x256xf32>
    %72 = vector.shape_cast %71 : vector<1x1x256xf32> to vector<1x256xf32>
    %73 = vector.shape_cast %70 : vector<1x256xf32> to vector<1x1x256xf32>
    tpu.vector_store %arg9[%c0_34, %c0_35, %c0_36], %73 {strides = array<i32>} : memref<1x1x256xf32, #tpu.memory_space<vmem>>, vector<1x1x256xf32>,
    %c0_37 = arith.constant 0 : index
    %c0_38 = arith.constant 0 : index
    %c0_39 = arith.constant 0 : index
    %74 = vector.load %arg10[%c0_37, %c0_38, %c0_39] : memref<1x1x256xf32, #tpu.memory_space<vmem>>, vector<1x1x256xf32>
    %75 = vector.shape_cast %74 : vector<1x1x256xf32> to vector<1x256xf32>
    %76 = arith.addf %75, %66 : vector<1x256xf32>
    %c0_40 = arith.constant 0 : index
    %c0_41 = arith.constant 0 : index
    %c0_42 = arith.constant 0 : index
    %77 = vector.load %arg10[%c0_40, %c0_41, %c0_42] : memref<1x1x256xf32, #tpu.memory_space<vmem>>, vector<1x1x256xf32>
    %78 = vector.shape_cast %77 : vector<1x1x256xf32> to vector<1x256xf32>
    %79 = vector.shape_cast %76 : vector<1x256xf32> to vector<1x1x256xf32>
    tpu.vector_store %arg10[%c0_40, %c0_41, %c0_42], %79 {strides = array<i32>} : memref<1x1x256xf32, #tpu.memory_space<vmem>>, vector<1x1x256xf32>,
    return
  }
  func.func @transform_0(%arg0: i32, %arg1: i32) -> (i32, i32, i32) {
    %c0_i32 = arith.constant 0 : i32
    %c0_i32_0 = arith.constant 0 : i32
    return %arg0, %c0_i32, %arg1 : i32, i32, i32
  }
  func.func @transform_1(%arg0: i32, %arg1: i32) -> (i32, i32) {
    %c0_i32 = arith.constant 0 : i32
    %c0_i32_0 = arith.constant 0 : i32
    %c0_i32_1 = arith.constant 0 : i32
    return %c0_i32, %c0_i32_0 : i32, i32
  }
  func.func @transform_2(%arg0: i32, %arg1: i32) -> (i32, i32) {
    %c0_i32 = arith.constant 0 : i32
    %c0_i32_0 = arith.constant 0 : i32
    %c0_i32_1 = arith.constant 0 : i32
    return %c0_i32, %c0_i32_0 : i32, i32
  }
  func.func @transform_3(%arg0: i32, %arg1: i32) -> (i32, i32) {
    %c0_i32 = arith.constant 0 : i32
    %c0_i32_0 = arith.constant 0 : i32
    %c0_i32_1 = arith.constant 0 : i32
    return %c0_i32, %c0_i32_0 : i32, i32
  }
  func.func @transform_4(%arg0: i32, %arg1: i32) -> (i32, i32, i32) {
    %c0_i32 = arith.constant 0 : i32
    %c0_i32_0 = arith.constant 0 : i32
    return %arg0, %c0_i32, %arg1 : i32, i32, i32
  }
  func.func @transform_5(%arg0: i32, %arg1: i32) -> (i32, i32, i32) {
    %c0_i32 = arith.constant 0 : i32
    %c0_i32_0 = arith.constant 0 : i32
    return %arg0, %c0_i32, %arg1 : i32, i32, i32
  }
  func.func @transform_6(%arg0: i32, %arg1: i32) -> (i32, i32, i32) {
    %c0_i32 = arith.constant 0 : i32
    %c0_i32_0 = arith.constant 0 : i32
    %c0_i32_1 = arith.constant 0 : i32
    return %arg0, %c0_i32, %c0_i32_0 : i32, i32, i32
  }
  func.func @transform_7(%arg0: i32, %arg1: i32) -> (i32, i32, i32) {
    %c0_i32 = arith.constant 0 : i32
    %c0_i32_0 = arith.constant 0 : i32
    %c0_i32_1 = arith.constant 0 : i32
    return %arg0, %c0_i32, %c0_i32_0 : i32, i32, i32
  }
  func.func @transform_8(%arg0: i32, %arg1: i32) -> (i32, i32, i32) {
    %c0_i32 = arith.constant 0 : i32
    %c0_i32_0 = arith.constant 0 : i32
    %c0_i32_1 = arith.constant 0 : i32
    return %arg0, %c0_i32, %c0_i32_0 : i32, i32, i32
  }
}

</mosaic_0001>

<llo_original>
// kernel: vq_embedding_ema_forward.1
$region0: #{vq_embedding_ema_forward.1}
  #allocation0 [shape = 'u32[]', space=smem, size = 0x4, offset = 0x4, fixed_abs, tag = 'smem constant byte address 0x4 - core index']
  #allocation1 [shape = 'u32[144,128]{1,0:T(1,128)}', space=vmem, size = 0x12000, scoped, tag = 'internal scratch']
  %s0 = inlined_call_operand.vmem [shape: f32[2,32,512], index: 0, kind: input, shape index: {}]
  %s1 = inlined_call_operand.vmem [shape: bf16[128,32], index: 1, kind: input, shape index: {}]
  %s2 = inlined_call_operand.vmem [shape: f32[32,128], index: 2, kind: input, shape index: {}]
  %s3 = inlined_call_operand.vmem [shape: f32[128,1], index: 3, kind: input, shape index: {}]
  %s4 = inlined_call_operand.vmem [shape: f32[2,32,512], index: 4, kind: output, shape index: {0}]
  %s5 = inlined_call_operand.vmem [shape: s32[2,1,512], index: 5, kind: output, shape index: {1}]
  %s6 = inlined_call_operand.vmem [shape: f32[2,128,1], index: 6, kind: output, shape index: {2}]
  %s7 = inlined_call_operand.vmem [shape: f32[2,1,256], index: 7, kind: output, shape index: {3}]
  %s8 = inlined_call_operand.vmem [shape: f32[2,1,256], index: 8, kind: output, shape index: {4}]
  %9 = xla_tuple %s4, %s5, %s6, %s7, %s8
  %s10 = sld [smem:[#allocation0]]
  $region127: #{vq_embedding_ema_forward.1} parent=0
    _
  %s12 = ssub.s32 1, %s10
  %s13 = scalar_select 0, %s12, %s10
  $region1: #{vq_embedding_ema_forward.1} parent=0
    #allocation2 [shape = 'u8[65536]{0}', space=vmem, size = 0x10000, scoped, tag = 'input window, operand 0']
    #allocation3 [shape = 'u8[65536]{0}', space=vmem, size = 0x10000, scoped, tag = 'output window, operand 0']
    loop: start=0, step=1, limit=6
    $region2: #{vq_embedding_ema_forward.1} parent=1 // loop_pre_header
      _
    $region3: #{vq_embedding_ema_forward.1} parent=1 // loop_header
      %s15 = sphi 0, %s19
      %p16 = scmp.ge.s32.totalorder %s15, 6
      %s22 = sphi 0, %s34
      %s23 = sphi 0, %s30
      %s24 = sphi 0, %s22
      %s25 = sphi 0, %s23
      %s26 = sphi 0, %s24
      %s27 = sphi 0, %s25
      %s39 = sphi 0, %s41
      %s42 = sphi 0, %s39
      %s43 = sphi 0, %s42
      %s59 = sphi 0, %s43
      %s63 = sphi 0, %s63
      %s65 = sphi 0, %s63
      %s66 = sphi 0, %s65
      %s80 = sphi 0, %s66
      %s84 = sphi 0, %s84
      %s86 = sphi 0, %s84
      %s87 = sphi 0, %s86
      %s101 = sphi 0, %s87
      %s105 = sphi 0, %s105
      %s107 = sphi 0, %s105
      %s108 = sphi 0, %s107
      %s122 = sphi 0, %s108
      %s130 = sphi 0, %s132
      %s133 = sphi 0, %s130
      %s134 = sphi 0, %s133
      %s150 = sphi 0, %s134
      %s158 = sphi 0, %s160
      %s161 = sphi 0, %s158
      %s162 = sphi 0, %s161
      %s178 = sphi 0, %s162
      %s184 = sphi 0, %s186
      %s187 = sphi 0, %s184
      %s188 = sphi 0, %s187
      %s204 = sphi 0, %s188
      %s210 = sphi 0, %s212
      %s213 = sphi 0, %s210
      %s214 = sphi 0, %s213
      %s230 = sphi 0, %s214
      %s236 = sphi 0, %s238
      %s239 = sphi 0, %s236
      %s240 = sphi 0, %s239
      %s256 = sphi 0, %s240
    $region4: #{vq_embedding_ema_forward.1} parent=1 // loop_header_branch
      %18 = sbr.rel (%p16) target = $region8
    $region5: #{vq_embedding_ema_forward.1} parent=1 // loop_body
      %s20 = ssub.s32 %s15, 1
      %s21 = ssub.s32 %s15, 2
      %s28 = sadd.s32 1, %s23
      %p29 = scmp.ge.s32.totalorder %s28, 2
      %s30 = scalar_select %p29, 0, %s28
      %s31 = sadd.s32 1, %s22
      %s32 = scalar_select %p29, %s31, %s22
      %p33 = scmp.ge.s32.totalorder %s32, 2
      %s34 = scalar_select %p33, 0, %s32
      %s35 = ssub.s32 %s22, %s34
      %s36 = ssub.s32 %s23, %s30
      %s37 = sor.u32 %s35, %s36
      %p38 = scmp.eq.s32.totalorder %s37, 0
      %s40 = sadd.s32 %s39, 1
      %s41 = scalar_select %p38, %s39, %s40
      %p44 = pneg %p38
      %p45 = scmp.eq.s32.totalorder %s15, 3
      %p46 = por %p44, %p45
      %p47 = scmp.ne.s32.totalorder %s39, %s42
      %p48 = scmp.eq.s32.totalorder %s15, 0
      %p49 = por %p47, %p48
      %p50 = scmp.ne.s32.totalorder %s39, %s42
      %p51 = scmp.eq.s32.totalorder %s20, 3
      %p52 = por %p50, %p51
      %p53 = scmp.ne.s32.totalorder %s42, %s43
      %p54 = scmp.eq.s32.totalorder %s20, 0
      %p55 = por %p53, %p54
      %p56 = scmp.ne.s32.totalorder %s42, %s43
      %p57 = scmp.eq.s32.totalorder %s21, 3
      %p58 = por %p56, %p57
      %p60 = scmp.ne.s32.totalorder %s43, %s59
      %p61 = scmp.eq.s32.totalorder %s21, 0
      %p62 = por %p60, %p61
      %s64 = sadd.s32 %s63, 1
      %p67 = scmp.eq.s32.totalorder %s15, 3
      %p68 = scmp.ne.s32.totalorder %s63, %s65
      %p69 = scmp.eq.s32.totalorder %s15, 0
      %p70 = por %p68, %p69
      %p71 = scmp.ne.s32.totalorder %s63, %s65
      %p72 = scmp.eq.s32.totalorder %s20, 3
      %p73 = por %p71, %p72
      %p74 = scmp.ne.s32.totalorder %s65, %s66
      %p75 = scmp.eq.s32.totalorder %s20, 0
      %p76 = por %p74, %p75
      %p77 = scmp.ne.s32.totalorder %s65, %s66
      %p78 = scmp.eq.s32.totalorder %s21, 3
      %p79 = por %p77, %p78
      %p81 = scmp.ne.s32.totalorder %s66, %s80
      %p82 = scmp.eq.s32.totalorder %s21, 0
      %p83 = por %p81, %p82
      %s85 = sadd.s32 %s84, 1
      %p88 = scmp.eq.s32.totalorder %s15, 3
      %p89 = scmp.ne.s32.totalorder %s84, %s86
      %p90 = scmp.eq.s32.totalorder %s15, 0
      %p91 = por %p89, %p90
      %p92 = scmp.ne.s32.totalorder %s84, %s86
      %p93 = scmp.eq.s32.totalorder %s20, 3
      %p94 = por %p92, %p93
      %p95 = scmp.ne.s32.totalorder %s86, %s87
      %p96 = scmp.eq.s32.totalorder %s20, 0
      %p97 = por %p95, %p96
      %p98 = scmp.ne.s32.totalorder %s86, %s87
      %p99 = scmp.eq.s32.totalorder %s21, 3
      %p100 = por %p98, %p99
      %p102 = scmp.ne.s32.totalorder %s87, %s101
      %p103 = scmp.eq.s32.totalorder %s21, 0
      %p104 = por %p102, %p103
      %s106 = sadd.s32 %s105, 1
      %p109 = scmp.eq.s32.totalorder %s15, 3
      %p110 = scmp.ne.s32.totalorder %s105, %s107
      %p111 = scmp.eq.s32.totalorder %s15, 0
      %p112 = por %p110, %p111
      %p113 = scmp.ne.s32.totalorder %s105, %s107
      %p114 = scmp.eq.s32.totalorder %s20, 3
      %p115 = por %p113, %p114
      %p116 = scmp.ne.s32.totalorder %s107, %s108
      %p117 = scmp.eq.s32.totalorder %s20, 0
      %p118 = por %p116, %p117
      %p119 = scmp.ne.s32.totalorder %s107, %s108
      %p120 = scmp.eq.s32.totalorder %s21, 3
      %p121 = por %p119, %p120
      %p123 = scmp.ne.s32.totalorder %s108, %s122
      %p124 = scmp.eq.s32.totalorder %s21, 0
      %p125 = por %p123, %p124
      %s126 = ssub.s32 %s22, %s34
      %s127 = ssub.s32 %s23, %s30
      %s128 = sor.u32 %s126, %s127
      %p129 = scmp.eq.s32.totalorder %s128, 0
      %s131 = sadd.s32 %s130, 1
      %s132 = scalar_select %p129, %s130, %s131
      %p135 = pneg %p129
      %p136 = scmp.eq.s32.totalorder %s15, 3
      %p137 = por %p135, %p136
      %p138 = scmp.ne.s32.totalorder %s130, %s133
      %p139 = scmp.eq.s32.totalorder %s15, 0
      %p140 = por %p138, %p139
      %p141 = scmp.ne.s32.totalorder %s130, %s133
      %p142 = scmp.eq.s32.totalorder %s20, 3
      %p143 = por %p141, %p142
      %p144 = scmp.ne.s32.totalorder %s133, %s134
      %p145 = scmp.eq.s32.totalorder %s20, 0
      %p146 = por %p144, %p145
      %p147 = scmp.ne.s32.totalorder %s133, %s134
      %p148 = scmp.eq.s32.totalorder %s21, 3
      %p149 = por %p147, %p148
      %p151 = scmp.ne.s32.totalorder %s134, %s150
      %p152 = scmp.eq.s32.totalorder %s21, 0
      %p153 = por %p151, %p152
      %s154 = ssub.s32 %s22, %s34
      %s155 = ssub.s32 %s23, %s30
      %s156 = sor.u32 %s154, %s155
      %p157 = scmp.eq.s32.totalorder %s156, 0
      %s159 = sadd.s32 %s158, 1
      %s160 = scalar_select %p157, %s158, %s159
      %p163 = pneg %p157
      %p164 = scmp.eq.s32.totalorder %s15, 3
      %p165 = por %p163, %p164
      %p166 = scmp.ne.s32.totalorder %s158, %s161
      %p167 = scmp.eq.s32.totalorder %s15, 0
      %p168 = por %p166, %p167
      %p169 = scmp.ne.s32.totalorder %s158, %s161
      %p170 = scmp.eq.s32.totalorder %s20, 3
      %p171 = por %p169, %p170
      %p172 = scmp.ne.s32.totalorder %s161, %s162
      %p173 = scmp.eq.s32.totalorder %s20, 0
      %p174 = por %p172, %p173
      %p175 = scmp.ne.s32.totalorder %s161, %s162
      %p176 = scmp.eq.s32.totalorder %s21, 3
      %p177 = por %p175, %p176
      %p179 = scmp.ne.s32.totalorder %s162, %s178
      %p180 = scmp.eq.s32.totalorder %s21, 0
      %p181 = por %p179, %p180
      %s182 = ssub.s32 %s22, %s34
      %p183 = scmp.eq.s32.totalorder %s182, 0
      %s185 = sadd.s32 %s184, 1
      %s186 = scalar_select %p183, %s184, %s185
      %p189 = pneg %p183
      %p190 = scmp.eq.s32.totalorder %s15, 3
      %p191 = por %p189, %p190
      %p192 = scmp.ne.s32.totalorder %s184, %s187
      %p193 = scmp.eq.s32.totalorder %s15, 0
      %p194 = por %p192, %p193
      %p195 = scmp.ne.s32.totalorder %s184, %s187
      %p196 = scmp.eq.s32.totalorder %s20, 3
      %p197 = por %p195, %p196
      %p198 = scmp.ne.s32.totalorder %s187, %s188
      %p199 = scmp.eq.s32.totalorder %s20, 0
      %p200 = por %p198, %p199
      %p201 = scmp.ne.s32.totalorder %s187, %s188
      %p202 = scmp.eq.s32.totalorder %s21, 3
      %p203 = por %p201, %p202
      %p205 = scmp.ne.s32.totalorder %s188, %s204
      %p206 = scmp.eq.s32.totalorder %s21, 0
      %p207 = por %p205, %p206
      %s208 = ssub.s32 %s22, %s34
      %p209 = scmp.eq.s32.totalorder %s208, 0
      %s211 = sadd.s32 %s210, 1
      %s212 = scalar_select %p209, %s210, %s211
      %p215 = pneg %p209
      %p216 = scmp.eq.s32.totalorder %s15, 3
      %p217 = por %p215, %p216
      %p218 = scmp.ne.s32.totalorder %s210, %s213
      %p219 = scmp.eq.s32.totalorder %s15, 0
      %p220 = por %p218, %p219
      %p221 = scmp.ne.s32.totalorder %s210, %s213
      %p222 = scmp.eq.s32.totalorder %s20, 3
      %p223 = por %p221, %p222
      %p224 = scmp.ne.s32.totalorder %s213, %s214
      %p225 = scmp.eq.s32.totalorder %s20, 0
      %p226 = por %p224, %p225
      %p227 = scmp.ne.s32.totalorder %s213, %s214
      %p228 = scmp.eq.s32.totalorder %s21, 3
      %p229 = por %p227, %p228
      %p231 = scmp.ne.s32.totalorder %s214, %s230
      %p232 = scmp.eq.s32.totalorder %s21, 0
      %p233 = por %p231, %p232
      %s234 = ssub.s32 %s22, %s34
      %p235 = scmp.eq.s32.totalorder %s234, 0
      %s237 = sadd.s32 %s236, 1
      %s238 = scalar_select %p235, %s236, %s237
      %p241 = pneg %p235
      %p242 = scmp.eq.s32.totalorder %s15, 3
      %p243 = por %p241, %p242
      %p244 = scmp.ne.s32.totalorder %s236, %s239
      %p245 = scmp.eq.s32.totalorder %s15, 0
      %p246 = por %p244, %p245
      %p247 = scmp.ne.s32.totalorder %s236, %s239
      %p248 = scmp.eq.s32.totalorder %s20, 3
      %p249 = por %p247, %p248
      %p250 = scmp.ne.s32.totalorder %s239, %s240
      %p251 = scmp.eq.s32.totalorder %s20, 0
      %p252 = por %p250, %p251
      %p253 = scmp.ne.s32.totalorder %s239, %s240
      %p254 = scmp.eq.s32.totalorder %s21, 3
      %p255 = por %p253, %p254
      %p257 = scmp.ne.s32.totalorder %s240, %s256
      %p258 = scmp.eq.s32.totalorder %s21, 0
      %p259 = por %p257, %p258
      %p260 = scmp.le.s32.totalorder 1, %s15
      %p261 = scmp.lt.s32.totalorder %s15, 5
      %p262 = pnand %p260, %p261
      %p263 = pneg %p262
      // Predicated region
      $region9: #{vq_embedding_ema_forward.1} parent=5 // pred_check
        _
      $region10: #{vq_embedding_ema_forward.1} parent=5 // pred_check_branch
        %265 = sbr.rel (%p262) target = $region12
      $region11: #{vq_embedding_ema_forward.1} parent=5 // pred_region
        %s266 = ssub.s32 %s15, 1
        // Predicated region
        $region13: #{vq_embedding_ema_forward.1} parent=11 // pred_check
          %p267 = pneg %p76
        $region14: #{vq_embedding_ema_forward.1} parent=11 // pred_check_branch
          %269 = sbr.rel (%p267) target = $region16
        $region15: #{vq_embedding_ema_forward.1} parent=11 // pred_region
          _
        $region16: #{vq_embedding_ema_forward.1} parent=11 // pred_fallthru
          _
        // Predicated region
        $region17: #{vq_embedding_ema_forward.1} parent=11 // pred_check
          %p270 = pneg %p97
        $region18: #{vq_embedding_ema_forward.1} parent=11 // pred_check_branch
          %272 = sbr.rel (%p270) target = $region20
        $region19: #{vq_embedding_ema_forward.1} parent=11 // pred_region
          _
        $region20: #{vq_embedding_ema_forward.1} parent=11 // pred_fallthru
          _
        // Predicated region
        $region21: #{vq_embedding_ema_forward.1} parent=11 // pred_check
          %p273 = pneg %p118
        $region22: #{vq_embedding_ema_forward.1} parent=11 // pred_check_branch
          %275 = sbr.rel (%p273) target = $region24
        $region23: #{vq_embedding_ema_forward.1} parent=11 // pred_region
          _
        $region24: #{vq_embedding_ema_forward.1} parent=11 // pred_fallthru
          _
      $region12: #{vq_embedding_ema_forward.1} parent=5 // pred_fallthru
        _
      %p276 = scmp.lt.s32.totalorder %s15, 4
      // Predicated region
      $region25: #{vq_embedding_ema_forward.1} parent=5 // pred_check
        %p277 = pneg %p276
      $region26: #{vq_embedding_ema_forward.1} parent=5 // pred_check_branch
        %279 = sbr.rel (%p277) target = $region28
      $region27: #{vq_embedding_ema_forward.1} parent=5 // pred_region
        // Predicated region
        $region29: #{vq_embedding_ema_forward.1} parent=27 // pred_check
          %p280 = pneg %p49
        $region30: #{vq_embedding_ema_forward.1} parent=27 // pred_check_branch
          %282 = sbr.rel (%p280) target = $region32
        $region31: #{vq_embedding_ema_forward.1} parent=27 // pred_region
          %s283 = sand.u32 %s39, 1
          %s284 = sand.u32 %s39, 1
          %s285 = smul.addr %s284, 64
          %s286 = scalar_lea.vmem [#allocation2], %s285
          %s287 = smul.u32 2, %s23
          %s288 = smul.addr %s22, 16
          %s289 = sadd.s32 %s287, %s288
          %s290 = smul.addr %s289, 8
          %s291 = scalar_lea.vmem %s0, %s290
          // Predicated region
          $region33: #{vq_embedding_ema_forward.1} parent=31 // pred_check
            _
          $region34: #{vq_embedding_ema_forward.1} parent=31 // pred_check_branch
            %293 = sbr.rel (0) target = $region36
          $region35: #{vq_embedding_ema_forward.1} parent=31 // pred_region
            // Predicated region
            $region37: #{vq_embedding_ema_forward.1} parent=35 // pred_check
              _
            $region38: #{vq_embedding_ema_forward.1} parent=35 // pred_check_branch
              %295 = sbr.rel (0) target = $region40
            $region39: #{vq_embedding_ema_forward.1} parent=35 // pred_region
              loop: start=0, step=1, limit=1
              $region41: #{vq_embedding_ema_forward.1} parent=39 // loop_pre_header
                _
              $region42: #{vq_embedding_ema_forward.1} parent=39 // loop_header
                %s297 = sphi 0, %s301
                %p298 = scmp.ge.s32.totalorder %s297, 1
                %s302 = sphi %s291, %s291
                %s303 = sphi %s286, %s286
              $region43: #{vq_embedding_ema_forward.1} parent=39 // loop_header_branch
                %300 = sbr.rel (%p298) target = $region47
              $region44: #{vq_embedding_ema_forward.1} parent=39 // loop_body
                %v304 = vld [vmem:[%s302] sm:$0xff]
                %305 = vst [vmem:[%s303] sm:$0xff] %v304
                %v306 = vld [vmem:[%s302 + $0x8] sm:$0xff]
                %307 = vst [vmem:[%s303 + $0x8] sm:$0xff] %v306
                %v308 = vld [vmem:[%s302 + $0x20] sm:$0xff]
                %309 = vst [vmem:[%s303 + $0x10] sm:$0xff] %v308
                %v310 = vld [vmem:[%s302 + $0x28] sm:$0xff]
                %311 = vst [vmem:[%s303 + $0x18] sm:$0xff] %v310
                %v312 = vld [vmem:[%s302 + $0x40] sm:$0xff]
                %313 = vst [vmem:[%s303 + $0x20] sm:$0xff] %v312
                %v314 = vld [vmem:[%s302 + $0x48] sm:$0xff]
                %315 = vst [vmem:[%s303 + $0x28] sm:$0xff] %v314
                %v316 = vld [vmem:[%s302 + $0x60] sm:$0xff]
                %317 = vst [vmem:[%s303 + $0x30] sm:$0xff] %v316
                %v318 = vld [vmem:[%s302 + $0x68] sm:$0xff]
                %319 = vst [vmem:[%s303 + $0x38] sm:$0xff] %v318
              $region45: #{vq_embedding_ema_forward.1} parent=39 // loop_footer
                %s301 = sadd.s32 1, %s297
              $region46: #{vq_embedding_ema_forward.1} parent=39 // loop_footer_branch
                %296 = sbr.rel target = $region42
              $region47: #{vq_embedding_ema_forward.1} parent=39 // loop_exit
                _
            $region40: #{vq_embedding_ema_forward.1} parent=35 // pred_fallthru
              _
            // Predicated region
            $region48: #{vq_embedding_ema_forward.1} parent=35 // pred_check
              _
            $region49: #{vq_embedding_ema_forward.1} parent=35 // pred_check_branch
              %321 = sbr.rel target = $region51
            $region50: #{vq_embedding_ema_forward.1} parent=35 // pred_region
              _
            $region51: #{vq_embedding_ema_forward.1} parent=35 // pred_fallthru
              _
          $region36: #{vq_embedding_ema_forward.1} parent=31 // pred_fallthru
            _
          %322 = vnop
        $region32: #{vq_embedding_ema_forward.1} parent=27 // pred_fallthru
          _
      $region28: #{vq_embedding_ema_forward.1} parent=5 // pred_fallthru
        _
      %p323 = scmp.le.s32.totalorder 1, %s15
      %p324 = scmp.lt.s32.totalorder %s15, 5
      %p325 = pnand %p323, %p324
      %p326 = pneg %p325
      // Predicated region
      $region52: #{vq_embedding_ema_forward.1} parent=5 // pred_check
        _
      $region53: #{vq_embedding_ema_forward.1} parent=5 // pred_check_branch
        %328 = sbr.rel (%p325) target = $region55
      $region54: #{vq_embedding_ema_forward.1} parent=5 // pred_region
        %s329 = ssub.s32 %s15, 1
        %s330 = sand.u32 %s42, 1
        %s331 = sand.u32 %s42, 1
        %s332 = smul.addr %s331, 64
        %s333 = scalar_lea.vmem [#allocation2], %s332
        // Predicated region
        $region56: #{vq_embedding_ema_forward.1} parent=54 // pred_check
          %p334 = pneg %p55
        $region57: #{vq_embedding_ema_forward.1} parent=54 // pred_check_branch
          %336 = sbr.rel (%p334) target = $region59
        $region58: #{vq_embedding_ema_forward.1} parent=54 // pred_region
          _
        $region59: #{vq_embedding_ema_forward.1} parent=54 // pred_fallthru
          _
        %s337 = sand.u32 %s42, 1
        %s338 = sand.u32 %s42, 1
        %s339 = smul.addr %s338, 64
        %s340 = scalar_lea.vmem [#allocation2], %s339
        %p341 = pneg %p55
        %p342 = pneg %p52
        %p343 = pneg %p76
        %p344 = pneg %p73
        %p345 = pneg %p97
        %p346 = pneg %p94
        %p347 = pneg %p118
        %p348 = pneg %p115
        %p349 = pneg %p146
        %p350 = pneg %p143
        %s351 = sand.u32 %s133, 1
        %s352 = sand.u32 %s133, 1
        %s353 = smul.addr %s352, 64
        %s354 = scalar_lea.vmem [#allocation3], %s353
        %p355 = pneg %p174
        %p356 = pneg %p171
        %s357 = smul.u32 2, %s25
        %p358 = scmp.lt.s32.totalorder %s24, 1
        %s359 = scalar_select %p358, %s24, 1
        %p360 = scmp.lt.s32.totalorder %s357, 3
        %s361 = scalar_select %p360, %s357, 3
        %s362 = smul.addr %s359, 4
        %s363 = sadd.s32 %s361, %s362
        %s364 = scalar_lea.vmem %s5, %s363
        %p365 = pneg %p200
        %p366 = pneg %p197
        %p367 = scmp.lt.s32.totalorder %s24, 1
        %s368 = scalar_select %p367, %s24, 1
        %s369 = smul.addr %s368, 16
        %s370 = smul.addr %s369, 8
        %s371 = scalar_lea.vmem %s6, %s370
        %p372 = pneg %p226
        %p373 = pneg %p223
        %p374 = scmp.lt.s32.totalorder %s24, 1
        %s375 = scalar_select %p374, %s24, 1
        %s376 = smul.addr %s375, 2
        %s377 = scalar_lea.vmem %s7, %s376
        %p378 = pneg %p252
        %p379 = pneg %p249
        %p380 = scmp.lt.s32.totalorder %s24, 1
        %s381 = scalar_select %p380, %s24, 1
        %s382 = smul.addr %s381, 2
        %s383 = scalar_lea.vmem %s8, %s382
        %s384 = smul.u32 2, %s25
        %s385 = smul.u32 2, %s25
        %s386 = smul.u32 2, %s25
        %p387 = scmp.lt.s32.totalorder %s24, 1
        %s388 = scalar_select %p387, %s24, 1
        %p389 = scmp.lt.s32.totalorder %s386, 3
        %s390 = scalar_select %p389, %s386, 3
        %s391 = smul.addr %s388, 4
        %s392 = sadd.s32 %s390, %s391
        %s393 = scalar_lea.vmem %s5, %s392
        %s394 = smul.u32 2, %s25
        %p395 = scmp.lt.s32.totalorder %s24, 1
        %s396 = scalar_select %p395, %s24, 1
        %s397 = smul.addr %s396, 16
        %s398 = smul.addr %s397, 8
        %s399 = scalar_lea.vmem %s6, %s398
        %p400 = scmp.lt.s32.totalorder %s24, 1
        %s401 = scalar_select %p400, %s24, 1
        %s402 = smul.addr %s401, 2
        %s403 = scalar_lea.vmem %s7, %s402
        %p404 = scmp.lt.s32.totalorder %s24, 1
        %s405 = scalar_select %p404, %s24, 1
        %s406 = smul.addr %s405, 2
        %s407 = scalar_lea.vmem %s8, %s406
        %p409 = scmp.eq.s32.totalorder %s25, 0
        // Predicated region
        $region60: #{vq_embedding_ema_forward.1} parent=54 // pred_check
          %p410 = pneg %p409
        $region61: #{vq_embedding_ema_forward.1} parent=54 // pred_check_branch
          %412 = sbr.rel (%p410) target = $region63
        $region62: #{vq_embedding_ema_forward.1} parent=54 // pred_region
          %vm413 = vcmask 7168
          %414 = vst.msk [vmem:[%s399] sm:$0xff] %vm413, 0.0
          %415 = vst.msk [vmem:[%s399 + $0x8] sm:$0xff] %vm413, 0.0
          %416 = vst.msk [vmem:[%s399 + $0x10] sm:$0xff] %vm413, 0.0
          %417 = vst.msk [vmem:[%s399 + $0x18] sm:$0xff] %vm413, 0.0
          %418 = vst.msk [vmem:[%s399 + $0x20] sm:$0xff] %vm413, 0.0
          %419 = vst.msk [vmem:[%s399 + $0x28] sm:$0xff] %vm413, 0.0
          %420 = vst.msk [vmem:[%s399 + $0x30] sm:$0xff] %vm413, 0.0
          %421 = vst.msk [vmem:[%s399 + $0x38] sm:$0xff] %vm413, 0.0
          %422 = vst.msk [vmem:[%s399 + $0x40] sm:$0xff] %vm413, 0.0
          %423 = vst.msk [vmem:[%s399 + $0x48] sm:$0xff] %vm413, 0.0
          %424 = vst.msk [vmem:[%s399 + $0x50] sm:$0xff] %vm413, 0.0
          %425 = vst.msk [vmem:[%s399 + $0x58] sm:$0xff] %vm413, 0.0
          %426 = vst.msk [vmem:[%s399 + $0x60] sm:$0xff] %vm413, 0.0
          %427 = vst.msk [vmem:[%s399 + $0x68] sm:$0xff] %vm413, 0.0
          %428 = vst.msk [vmem:[%s399 + $0x70] sm:$0xff] %vm413, 0.0
          %429 = vst.msk [vmem:[%s399 + $0x78] sm:$0xff] %vm413, 0.0
          %v430 = vlaneseq
          %vm431 = vcmp.ge.s32.totalorder %v430, 0
          %vm432 = vcmp.lt.s32.totalorder %v430, 256
          %vm433 = vmand %vm431, %vm432
          %434 = vst.msk [vmem:[%s403] sm:$0x3] %vm433, 0.0
          %435 = vst.msk [vmem:[%s407] sm:$0x3] %vm433, 0.0
        $region63: #{vq_embedding_ema_forward.1} parent=54 // pred_fallthru
          _
        %v436 = vld [vmem:[%s333] sm:$0xff]
        %v437 = vld [vmem:[%s333 + $0x8] sm:$0xff]
        %v438 = vld [vmem:[%s333 + $0x10] sm:$0xff]
        %v439 = vld [vmem:[%s333 + $0x18] sm:$0xff]
        %v440 = vld [vmem:[%s333 + $0x20] sm:$0xff]
        %v441 = vld [vmem:[%s333 + $0x28] sm:$0xff]
        %v442 = vld [vmem:[%s333 + $0x30] sm:$0xff]
        %v443 = vld [vmem:[%s333 + $0x38] sm:$0xff]
        %v444 = vpack.c.bf16 %v438, %v436
        %v445 = vpack.c.bf16 %v439, %v437
        %v446 = vpack.c.bf16 %v442, %v440
        %v447 = vpack.c.bf16 %v443, %v441
        %v448 = vld [vmem:[%s1] sm:$0xf]
        %v449 = vld [vmem:[%s1 + $0x4] sm:$0xf]
        %v450 = vld [vmem:[%s1 + $0x8] sm:$0xf]
        %v451 = vld [vmem:[%s1 + $0xc] sm:$0xf]
        %v452 = vld [vmem:[%s1 + $0x10] sm:$0xf]
        %v453 = vld [vmem:[%s1 + $0x14] sm:$0xf]
        %v454 = vld [vmem:[%s1 + $0x18] sm:$0xf]
        %v455 = vld [vmem:[%s1 + $0x1c] sm:$0xf]
        %v456 = vld [vmem:[%s1 + $0x20] sm:$0xf]
        %v457 = vld [vmem:[%s1 + $0x24] sm:$0xf]
        %v458 = vld [vmem:[%s1 + $0x28] sm:$0xf]
        %v459 = vld [vmem:[%s1 + $0x2c] sm:$0xf]
        %v460 = vld [vmem:[%s1 + $0x30] sm:$0xf]
        %v461 = vld [vmem:[%s1 + $0x34] sm:$0xf]
        %v462 = vld [vmem:[%s1 + $0x38] sm:$0xf]
        %v463 = vld [vmem:[%s1 + $0x3c] sm:$0xf]
        %v480 = vunpack.c.l.b16 %v448
        %v481 = vunpack.c.l.b16 %v449
        %v482 = vunpack.c.l.b16 %v450
        %v483 = vunpack.c.l.b16 %v451
        %v484 = vunpack.c.l.b16 %v452
        %v485 = vunpack.c.l.b16 %v453
        %v486 = vunpack.c.l.b16 %v454
        %v487 = vunpack.c.l.b16 %v455
        %v488 = vunpack.c.l.b16 %v456
        %v489 = vunpack.c.l.b16 %v457
        %v490 = vunpack.c.l.b16 %v458
        %v491 = vunpack.c.l.b16 %v459
        %v492 = vunpack.c.l.b16 %v460
        %v493 = vunpack.c.l.b16 %v461
        %v494 = vunpack.c.l.b16 %v462
        %v495 = vunpack.c.l.b16 %v463
        %v496 = vpack.c.b16 %v481, %v480
        %v497 = vpack.c.b16 %v483, %v482
        %v498 = vpack.c.b16 %v485, %v484
        %v499 = vpack.c.b16 %v487, %v486
        %v500 = vpack.c.b16 %v489, %v488
        %v501 = vpack.c.b16 %v491, %v490
        %v502 = vpack.c.b16 %v493, %v492
        %v503 = vpack.c.b16 %v495, %v494
        %vm504 = vcmask 261120
        %v506 = vsel %vm504, %v496, 0
        %v509 = vsel %vm504, %v497, 0
        %v512 = vsel %vm504, %v498, 0
        %v515 = vsel %vm504, %v499, 0
        %v518 = vsel %vm504, %v500, 0
        %v521 = vsel %vm504, %v501, 0
        %v524 = vsel %vm504, %v502, 0
        %v527 = vsel %vm504, %v503, 0
        %529 = vmatprep.subr.bf16.mxu0 %v445
        %530 = vmatpush1.bf16.msra.mxu0 %v444
        %531 = vmatprep.subr.bf16.mxu0 %v447
        %532 = vmatpush1.bf16.msra.mxu0 %v446
        %533 = vmatprep.subr.bf16.mxu0 0
        %534 = vmatpush1.bf16.msra.mxu0 0
        %535 = vmatprep.subr.bf16.mxu0 0
        %536 = vmatpush1.bf16.msra.mxu0 0
        %537 = vmatprep.subr.bf16.mxu0 0
        %538 = vmatpush1.bf16.msra.mxu0 0
        %539 = vmatprep.subr.bf16.mxu0 0
        %540 = vmatpush1.bf16.msra.mxu0 0
        %541 = vmatprep.subr.bf16.mxu0 0
        %542 = vmatpush1.bf16.msra.mxu0 0
        %543 = vmatprep.subr.bf16.mxu0 0
        %544 = vmatpush1.bf16.msra.mxu0 0
        %545 = vmatprep.subr.bf16.mxu0 0
        %546 = vmatpush1.bf16.msra.mxu0 0
        %547 = vmatprep.subr.bf16.mxu0 0
        %548 = vmatpush1.bf16.msra.mxu0 0
        %549 = vmatprep.subr.bf16.mxu0 0
        %550 = vmatpush1.bf16.msra.mxu0 0
        %551 = vmatprep.subr.bf16.mxu0 0
        %552 = vmatpush1.bf16.msra.mxu0 0
        %553 = vmatprep.subr.bf16.mxu0 0
        %554 = vmatpush1.bf16.msra.mxu0 0
        %555 = vmatprep.subr.bf16.mxu0 0
        %556 = vmatpush1.bf16.msra.mxu0 0
        %557 = vmatprep.subr.bf16.mxu0 0
        %558 = vmatpush1.bf16.msra.mxu0 0
        %559 = vmatprep.subr.bf16.mxu0 0
        %560 = vmatpush1.bf16.msra.mxu0 0
        %561 = vmatprep.mubr.bf16.mxu0 0
        %562 = vmatmul.mubr.bf16.gmra.mrb[0].mxu0 %v506
        %v563 = vpop.f32.mrb[0].mxu0
        %v564 = vadd.f32 0.0, %v563
        %v565 = vpop.f32.mrb[0].mxu0
        %v566 = vadd.f32 0.0, %v565
        %v567 = vpop.f32.mrb[0].mxu0
        %v568 = vadd.f32 0.0, %v567
        %v569 = vpop.f32.mrb[0].mxu0
        %v570 = vadd.f32 0.0, %v569
        %571 = vmatprep.mubr.bf16.mxu0 0
        %572 = vmatmul.mubr.bf16.gmra.mrb[0].mxu0 %v509
        %v573 = vpop.f32.mrb[0].mxu0
        %v574 = vadd.f32 0.0, %v573
        %v575 = vpop.f32.mrb[0].mxu0
        %v576 = vadd.f32 0.0, %v575
        %v577 = vpop.f32.mrb[0].mxu0
        %v578 = vadd.f32 0.0, %v577
        %v579 = vpop.f32.mrb[0].mxu0
        %v580 = vadd.f32 0.0, %v579
        %581 = vmatprep.mubr.bf16.mxu0 0
        %582 = vmatmul.mubr.bf16.gmra.mrb[0].mxu0 %v512
        %v583 = vpop.f32.mrb[0].mxu0
        %v584 = vadd.f32 0.0, %v583
        %v585 = vpop.f32.mrb[0].mxu0
        %v586 = vadd.f32 0.0, %v585
        %v587 = vpop.f32.mrb[0].mxu0
        %v588 = vadd.f32 0.0, %v587
        %v589 = vpop.f32.mrb[0].mxu0
        %v590 = vadd.f32 0.0, %v589
        %591 = vmatprep.mubr.bf16.mxu0 0
        %592 = vmatmul.mubr.bf16.gmra.mrb[0].mxu0 %v515
        %v593 = vpop.f32.mrb[0].mxu0
        %v594 = vadd.f32 0.0, %v593
        %v595 = vpop.f32.mrb[0].mxu0
        %v596 = vadd.f32 0.0, %v595
        %v597 = vpop.f32.mrb[0].mxu0
        %v598 = vadd.f32 0.0, %v597
        %v599 = vpop.f32.mrb[0].mxu0
        %v600 = vadd.f32 0.0, %v599
        %601 = vmatprep.mubr.bf16.mxu0 0
        %602 = vmatmul.mubr.bf16.gmra.mrb[0].mxu0 %v518
        %v603 = vpop.f32.mrb[0].mxu0
        %v604 = vadd.f32 0.0, %v603
        %v605 = vpop.f32.mrb[0].mxu0
        %v606 = vadd.f32 0.0, %v605
        %v607 = vpop.f32.mrb[0].mxu0
        %v608 = vadd.f32 0.0, %v607
        %v609 = vpop.f32.mrb[0].mxu0
        %v610 = vadd.f32 0.0, %v609
        %611 = vmatprep.mubr.bf16.mxu0 0
        %612 = vmatmul.mubr.bf16.gmra.mrb[0].mxu0 %v521
        %v613 = vpop.f32.mrb[0].mxu0
        %v614 = vadd.f32 0.0, %v613
        %v615 = vpop.f32.mrb[0].mxu0
        %v616 = vadd.f32 0.0, %v615
        %v617 = vpop.f32.mrb[0].mxu0
        %v618 = vadd.f32 0.0, %v617
        %v619 = vpop.f32.mrb[0].mxu0
        %v620 = vadd.f32 0.0, %v619
        %621 = vmatprep.mubr.bf16.mxu0 0
        %622 = vmatmul.mubr.bf16.gmra.mrb[0].mxu0 %v524
        %v623 = vpop.f32.mrb[0].mxu0
        %v624 = vadd.f32 0.0, %v623
        %v625 = vpop.f32.mrb[0].mxu0
        %v626 = vadd.f32 0.0, %v625
        %v627 = vpop.f32.mrb[0].mxu0
        %v628 = vadd.f32 0.0, %v627
        %v629 = vpop.f32.mrb[0].mxu0
        %v630 = vadd.f32 0.0, %v629
        %631 = vmatprep.mubr.bf16.mxu0 0
        %632 = vmatmul.mubr.bf16.gmra.mrb[0].mxu0 %v527
        %v633 = vpop.f32.mrb[0].mxu0
        %v634 = vadd.f32 0.0, %v633
        %v635 = vpop.f32.mrb[0].mxu0
        %v636 = vadd.f32 0.0, %v635
        %v637 = vpop.f32.mrb[0].mxu0
        %v638 = vadd.f32 0.0, %v637
        %v639 = vpop.f32.mrb[0].mxu0
        %v640 = vadd.f32 0.0, %v639
        %641 = vdwg.mxu0
        %v642 = vld [vmem:[%s3] sm:$0xff]
        %v643 = vld [vmem:[%s3 + $0x8] sm:$0xff]
        %v644 = vld [vmem:[%s3 + $0x10] sm:$0xff]
        %v645 = vld [vmem:[%s3 + $0x18] sm:$0xff]
        %v646 = vld [vmem:[%s3 + $0x20] sm:$0xff]
        %v647 = vld [vmem:[%s3 + $0x28] sm:$0xff]
        %v648 = vld [vmem:[%s3 + $0x30] sm:$0xff]
        %v649 = vld [vmem:[%s3 + $0x38] sm:$0xff]
        %v650 = vld [vmem:[%s3 + $0x40] sm:$0xff]
        %v651 = vld [vmem:[%s3 + $0x48] sm:$0xff]
        %v652 = vld [vmem:[%s3 + $0x50] sm:$0xff]
        %v653 = vld [vmem:[%s3 + $0x58] sm:$0xff]
        %v654 = vld [vmem:[%s3 + $0x60] sm:$0xff]
        %v655 = vld [vmem:[%s3 + $0x68] sm:$0xff]
        %v656 = vld [vmem:[%s3 + $0x70] sm:$0xff]
        %v657 = vld [vmem:[%s3 + $0x78] sm:$0xff]
        %v658 = vmul.f32 %v564, 2.0
        %v659 = vmul.f32 %v566, 2.0
        %v660 = vmul.f32 %v568, 2.0
        %v661 = vmul.f32 %v570, 2.0
        %v662 = vmul.f32 %v574, 2.0
        %v663 = vmul.f32 %v576, 2.0
        %v664 = vmul.f32 %v578, 2.0
        %v665 = vmul.f32 %v580, 2.0
        %v666 = vmul.f32 %v584, 2.0
        %v667 = vmul.f32 %v586, 2.0
        %v668 = vmul.f32 %v588, 2.0
        %v669 = vmul.f32 %v590, 2.0
        %v670 = vmul.f32 %v594, 2.0
        %v671 = vmul.f32 %v596, 2.0
        %v672 = vmul.f32 %v598, 2.0
        %v673 = vmul.f32 %v600, 2.0
        %v674 = vmul.f32 %v604, 2.0
        %v675 = vmul.f32 %v606, 2.0
        %v676 = vmul.f32 %v608, 2.0
        %v677 = vmul.f32 %v610, 2.0
        %v678 = vmul.f32 %v614, 2.0
        %v679 = vmul.f32 %v616, 2.0
        %v680 = vmul.f32 %v618, 2.0
        %v681 = vmul.f32 %v620, 2.0
        %v682 = vmul.f32 %v624, 2.0
        %v683 = vmul.f32 %v626, 2.0
        %v684 = vmul.f32 %v628, 2.0
        %v685 = vmul.f32 %v630, 2.0
        %v686 = vmul.f32 %v634, 2.0
        %v687 = vmul.f32 %v636, 2.0
        %v688 = vmul.f32 %v638, 2.0
        %v689 = vmul.f32 %v640, 2.0
        %691 = vset.pattern.permute.xlu0 0
        %692 = vperm.xlu0 %691, %v642
        %v693 = vpop.permute.xlu0 %692
        %696 = vset.pattern.permute.xlu0 0
        %697 = vperm.xlu0 %696, %v643
        %v698 = vpop.permute.xlu0 %697
        %701 = vset.pattern.permute.xlu0 0
        %702 = vperm.xlu0 %701, %v644
        %v703 = vpop.permute.xlu0 %702
        %706 = vset.pattern.permute.xlu0 0
        %707 = vperm.xlu0 %706, %v645
        %v708 = vpop.permute.xlu0 %707
        %711 = vset.pattern.permute.xlu0 0
        %712 = vperm.xlu0 %711, %v646
        %v713 = vpop.permute.xlu0 %712
        %716 = vset.pattern.permute.xlu0 0
        %717 = vperm.xlu0 %716, %v647
        %v718 = vpop.permute.xlu0 %717
        %721 = vset.pattern.permute.xlu0 0
        %722 = vperm.xlu0 %721, %v648
        %v723 = vpop.permute.xlu0 %722
        %726 = vset.pattern.permute.xlu0 0
        %727 = vperm.xlu0 %726, %v649
        %v728 = vpop.permute.xlu0 %727
        %731 = vset.pattern.permute.xlu0 0
        %732 = vperm.xlu0 %731, %v650
        %v733 = vpop.permute.xlu0 %732
        %736 = vset.pattern.permute.xlu0 0
        %737 = vperm.xlu0 %736, %v651
        %v738 = vpop.permute.xlu0 %737
        %741 = vset.pattern.permute.xlu0 0
        %742 = vperm.xlu0 %741, %v652
        %v743 = vpop.permute.xlu0 %742
        %746 = vset.pattern.permute.xlu0 0
        %747 = vperm.xlu0 %746, %v653
        %v748 = vpop.permute.xlu0 %747
        %751 = vset.pattern.permute.xlu0 0
        %752 = vperm.xlu0 %751, %v654
        %v753 = vpop.permute.xlu0 %752
        %756 = vset.pattern.permute.xlu0 0
        %757 = vperm.xlu0 %756, %v655
        %v758 = vpop.permute.xlu0 %757
        %761 = vset.pattern.permute.xlu0 0
        %762 = vperm.xlu0 %761, %v656
        %v763 = vpop.permute.xlu0 %762
        %766 = vset.pattern.permute.xlu0 0
        %767 = vperm.xlu0 %766, %v657
        %v768 = vpop.permute.xlu0 %767
        %v770 = vsub.f32 %v693, %v658
        %v771 = vsub.f32 %v693, %v659
        %v772 = vsub.f32 %v698, %v660
        %v773 = vsub.f32 %v698, %v661
        %v774 = vsub.f32 %v703, %v662
        %v775 = vsub.f32 %v703, %v663
        %v776 = vsub.f32 %v708, %v664
        %v777 = vsub.f32 %v708, %v665
        %v778 = vsub.f32 %v713, %v666
        %v779 = vsub.f32 %v713, %v667
        %v780 = vsub.f32 %v718, %v668
        %v781 = vsub.f32 %v718, %v669
        %v782 = vsub.f32 %v723, %v670
        %v783 = vsub.f32 %v723, %v671
        %v784 = vsub.f32 %v728, %v672
        %v785 = vsub.f32 %v728, %v673
        %v786 = vsub.f32 %v733, %v674
        %v787 = vsub.f32 %v733, %v675
        %v788 = vsub.f32 %v738, %v676
        %v789 = vsub.f32 %v738, %v677
        %v790 = vsub.f32 %v743, %v678
        %v791 = vsub.f32 %v743, %v679
        %v792 = vsub.f32 %v748, %v680
        %v793 = vsub.f32 %v748, %v681
        %v794 = vsub.f32 %v753, %v682
        %v795 = vsub.f32 %v753, %v683
        %v796 = vsub.f32 %v758, %v684
        %v797 = vsub.f32 %v758, %v685
        %v798 = vsub.f32 %v763, %v686
        %v799 = vsub.f32 %v763, %v687
        %v800 = vsub.f32 %v768, %v688
        %v801 = vsub.f32 %v768, %v689
        %v802 = vmin.f32 %v770, %v774
        %v803 = vmin.f32 %v772, %v776
        %v804 = vmin.f32 %v802, %v778
        %v805 = vmin.f32 %v803, %v780
        %v806 = vmin.f32 %v804, %v782
        %v807 = vmin.f32 %v805, %v784
        %v808 = vmin.f32 %v806, %v786
        %v809 = vmin.f32 %v807, %v788
        %v810 = vmin.f32 %v808, %v790
        %v811 = vmin.f32 %v809, %v792
        %v812 = vmin.f32 %v810, %v794
        %v813 = vmin.f32 %v811, %v796
        %v814 = vmin.f32 %v812, %v798
        %v815 = vmin.f32 %v813, %v800
        %v816 = vmin.f32 %v814, %v815
        %v817 = vrot.slane %v816, 4
        %v818 = vmin.f32 %v816, %v817
        %v819 = vrot.slane %v818, 2
        %v820 = vmin.f32 %v818, %v819
        %v821 = vrot.slane %v820, 1
        %v822 = vmin.f32 %v820, %v821
        %v823 = vmin.f32 %v771, %v775
        %v824 = vmin.f32 %v773, %v777
        %v825 = vmin.f32 %v823, %v779
        %v826 = vmin.f32 %v824, %v781
        %v827 = vmin.f32 %v825, %v783
        %v828 = vmin.f32 %v826, %v785
        %v829 = vmin.f32 %v827, %v787
        %v830 = vmin.f32 %v828, %v789
        %v831 = vmin.f32 %v829, %v791
        %v832 = vmin.f32 %v830, %v793
        %v833 = vmin.f32 %v831, %v795
        %v834 = vmin.f32 %v832, %v797
        %v835 = vmin.f32 %v833, %v799
        %v836 = vmin.f32 %v834, %v801
        %v837 = vmin.f32 %v835, %v836
        %v838 = vrot.slane %v837, 4
        %v839 = vmin.f32 %v837, %v838
        %v840 = vrot.slane %v839, 2
        %v841 = vmin.f32 %v839, %v840
        %v842 = vrot.slane %v841, 1
        %v843 = vmin.f32 %v841, %v842
        %v844 = vlaneseq
        %v845 = vshrl.u32 %v844, 7
        %v846 = vadd.s32 %v845, 8
        %v847 = vadd.s32 %v845, 16
        %v848 = vadd.s32 %v845, 24
        %v849 = vadd.s32 %v845, 32
        %v850 = vadd.s32 %v845, 40
        %v851 = vadd.s32 %v845, 48
        %v852 = vadd.s32 %v845, 56
        %v853 = vadd.s32 %v845, 64
        %v854 = vadd.s32 %v845, 72
        %v855 = vadd.s32 %v845, 80
        %v856 = vadd.s32 %v845, 88
        %v857 = vadd.s32 %v845, 96
        %v858 = vadd.s32 %v845, 104
        %v859 = vadd.s32 %v845, 112
        %v860 = vadd.s32 %v845, 120
        %vm861 = vcmp.eq.f32.partialorder %v770, %v822
        %vm862 = vcmp.eq.f32.partialorder %v771, %v843
        %vm863 = vcmp.eq.f32.partialorder %v772, %v822
        %vm864 = vcmp.eq.f32.partialorder %v773, %v843
        %vm865 = vcmp.eq.f32.partialorder %v774, %v822
        %vm866 = vcmp.eq.f32.partialorder %v775, %v843
        %vm867 = vcmp.eq.f32.partialorder %v776, %v822
        %vm868 = vcmp.eq.f32.partialorder %v777, %v843
        %vm869 = vcmp.eq.f32.partialorder %v778, %v822
        %vm870 = vcmp.eq.f32.partialorder %v779, %v843
        %vm871 = vcmp.eq.f32.partialorder %v780, %v822
        %vm872 = vcmp.eq.f32.partialorder %v781, %v843
        %vm873 = vcmp.eq.f32.partialorder %v782, %v822
        %vm874 = vcmp.eq.f32.partialorder %v783, %v843
        %vm875 = vcmp.eq.f32.partialorder %v784, %v822
        %vm876 = vcmp.eq.f32.partialorder %v785, %v843
        %vm877 = vcmp.eq.f32.partialorder %v786, %v822
        %vm878 = vcmp.eq.f32.partialorder %v787, %v843
        %vm879 = vcmp.eq.f32.partialorder %v788, %v822
        %vm880 = vcmp.eq.f32.partialorder %v789, %v843
        %vm881 = vcmp.eq.f32.partialorder %v790, %v822
        %vm882 = vcmp.eq.f32.partialorder %v791, %v843
        %vm883 = vcmp.eq.f32.partialorder %v792, %v822
        %vm884 = vcmp.eq.f32.partialorder %v793, %v843
        %vm885 = vcmp.eq.f32.partialorder %v794, %v822
        %vm886 = vcmp.eq.f32.partialorder %v795, %v843
        %vm887 = vcmp.eq.f32.partialorder %v796, %v822
        %vm888 = vcmp.eq.f32.partialorder %v797, %v843
        %vm889 = vcmp.eq.f32.partialorder %v798, %v822
        %vm890 = vcmp.eq.f32.partialorder %v799, %v843
        %vm891 = vcmp.eq.f32.partialorder %v800, %v822
        %vm892 = vcmp.eq.f32.partialorder %v801, %v843
        %v893 = vcvt.s32.f32 %v845
        %v894 = vcvt.s32.f32 %v846
        %v895 = vcvt.s32.f32 %v847
        %v896 = vcvt.s32.f32 %v848
        %v897 = vcvt.s32.f32 %v849
        %v898 = vcvt.s32.f32 %v850
        %v899 = vcvt.s32.f32 %v851
        %v900 = vcvt.s32.f32 %v852
        %v901 = vcvt.s32.f32 %v853
        %v902 = vcvt.s32.f32 %v854
        %v903 = vcvt.s32.f32 %v855
        %v904 = vcvt.s32.f32 %v856
        %v905 = vcvt.s32.f32 %v857
        %v906 = vcvt.s32.f32 %v858
        %v907 = vcvt.s32.f32 %v859
        %v908 = vcvt.s32.f32 %v860
        %v909 = vsel %vm861, %v893, 128.0
        %v910 = vsel %vm862, %v893, 128.0
        %v911 = vsel %vm863, %v894, 128.0
        %v912 = vsel %vm864, %v894, 128.0
        %v913 = vsel %vm865, %v895, 128.0
        %v914 = vsel %vm866, %v895, 128.0
        %v915 = vsel %vm867, %v896, 128.0
        %v916 = vsel %vm868, %v896, 128.0
        %v917 = vsel %vm869, %v897, 128.0
        %v918 = vsel %vm870, %v897, 128.0
        %v919 = vsel %vm871, %v898, 128.0
        %v920 = vsel %vm872, %v898, 128.0
        %v921 = vsel %vm873, %v899, 128.0
        %v922 = vsel %vm874, %v899, 128.0
        %v923 = vsel %vm875, %v900, 128.0
        %v924 = vsel %vm876, %v900, 128.0
        %v925 = vsel %vm877, %v901, 128.0
        %v926 = vsel %vm878, %v901, 128.0
        %v927 = vsel %vm879, %v902, 128.0
        %v928 = vsel %vm880, %v902, 128.0
        %v929 = vsel %vm881, %v903, 128.0
        %v930 = vsel %vm882, %v903, 128.0
        %v931 = vsel %vm883, %v904, 128.0
        %v932 = vsel %vm884, %v904, 128.0
        %v933 = vsel %vm885, %v905, 128.0
        %v934 = vsel %vm886, %v905, 128.0
        %v935 = vsel %vm887, %v906, 128.0
        %v936 = vsel %vm888, %v906, 128.0
        %v937 = vsel %vm889, %v907, 128.0
        %v938 = vsel %vm890, %v907, 128.0
        %v939 = vsel %vm891, %v908, 128.0
        %v940 = vsel %vm892, %v908, 128.0
        %v941 = vmin.f32 %v909, %v913
        %v942 = vmin.f32 %v911, %v915
        %v943 = vmin.f32 %v941, %v917
        %v944 = vmin.f32 %v942, %v919
        %v945 = vmin.f32 %v943, %v921
        %v946 = vmin.f32 %v944, %v923
        %v947 = vmin.f32 %v945, %v925
        %v948 = vmin.f32 %v946, %v927
        %v949 = vmin.f32 %v947, %v929
        %v950 = vmin.f32 %v948, %v931
        %v951 = vmin.f32 %v949, %v933
        %v952 = vmin.f32 %v950, %v935
        %v953 = vmin.f32 %v951, %v937
        %v954 = vmin.f32 %v952, %v939
        %v955 = vmin.f32 %v953, %v954
        %v956 = vrot.slane %v955, 4
        %v957 = vmin.f32 %v955, %v956
        %v958 = vrot.slane %v957, 2
        %v959 = vmin.f32 %v957, %v958
        %v960 = vrot.slane %v959, 1
        %v961 = vmin.f32 %v959, %v960
        %v962 = vmin.f32 %v910, %v914
        %v963 = vmin.f32 %v912, %v916
        %v964 = vmin.f32 %v962, %v918
        %v965 = vmin.f32 %v963, %v920
        %v966 = vmin.f32 %v964, %v922
        %v967 = vmin.f32 %v965, %v924
        %v968 = vmin.f32 %v966, %v926
        %v969 = vmin.f32 %v967, %v928
        %v970 = vmin.f32 %v968, %v930
        %v971 = vmin.f32 %v969, %v932
        %v972 = vmin.f32 %v970, %v934
        %v973 = vmin.f32 %v971, %v936
        %v974 = vmin.f32 %v972, %v938
        %v975 = vmin.f32 %v973, %v940
        %v976 = vmin.f32 %v974, %v975
        %v977 = vrot.slane %v976, 4
        %v978 = vmin.f32 %v976, %v977
        %v979 = vrot.slane %v978, 2
        %v980 = vmin.f32 %v978, %v979
        %v981 = vrot.slane %v980, 1
        %v982 = vmin.f32 %v980, %v981
        %v983 = vcvt.f32.s32.to.zero.pseudo %v961
        %v984 = vcvt.f32.s32.to.zero.pseudo %v982
        %v985 = vcombine.low %v983, %v984
        %v987 = vunpack.c.l.s4 1966171168
        %v988 = vunpack.c.0.s8 %v987
        %v989 = vlaneseq
        %v990 = vshrl.u32 %v989, 7
        %v991 = vsub.s32 %v988, %v990
        %v992 = vrot.slane %v985, %v991
        %v994 = vunpack.c.l.s4 1966171168
        %v995 = vunpack.c.0.s8 %v994
        %v996 = vlaneseq
        %v997 = vshrl.u32 %v996, 7
        %v998 = vsub.s32 %v995, %v997
        %v999 = vrot.slane %v992, %v998
        %v1000 = vlaneseq
        %vm1001 = vcmp.ge.s32.totalorder %v1000, 0
        %vm1002 = vcmp.lt.s32.totalorder %v1000, 256
        %vm1003 = vmand %vm1001, %vm1002
        %1004 = vst.msk [vmem:[%s393] sm:$0x3] %vm1003, %v999
        %vm1005 = vcmp.eq.s32.totalorder %v845, %v983
        %vm1006 = vcmp.eq.s32.totalorder %v845, %v984
        %vm1007 = vcmp.eq.s32.totalorder %v846, %v983
        %vm1008 = vcmp.eq.s32.totalorder %v846, %v984
        %vm1009 = vcmp.eq.s32.totalorder %v847, %v983
        %vm1010 = vcmp.eq.s32.totalorder %v847, %v984
        %vm1011 = vcmp.eq.s32.totalorder %v848, %v983
        %vm1012 = vcmp.eq.s32.totalorder %v848, %v984
        %vm1013 = vcmp.eq.s32.totalorder %v849, %v983
        %vm1014 = vcmp.eq.s32.totalorder %v849, %v984
        %vm1015 = vcmp.eq.s32.totalorder %v850, %v983
        %vm1016 = vcmp.eq.s32.totalorder %v850, %v984
        %vm1017 = vcmp.eq.s32.totalorder %v851, %v983
        %vm1018 = vcmp.eq.s32.totalorder %v851, %v984
        %vm1019 = vcmp.eq.s32.totalorder %v852, %v983
        %vm1020 = vcmp.eq.s32.totalorder %v852, %v984
        %vm1021 = vcmp.eq.s32.totalorder %v853, %v983
        %vm1022 = vcmp.eq.s32.totalorder %v853, %v984
        %vm1023 = vcmp.eq.s32.totalorder %v854, %v983
        %vm1024 = vcmp.eq.s32.totalorder %v854, %v984
        %vm1025 = vcmp.eq.s32.totalorder %v855, %v983
        %vm1026 = vcmp.eq.s32.totalorder %v855, %v984
        %vm1027 = vcmp.eq.s32.totalorder %v856, %v983
        %vm1028 = vcmp.eq.s32.totalorder %v856, %v984
        %vm1029 = vcmp.eq.s32.totalorder %v857, %v983
        %vm1030 = vcmp.eq.s32.totalorder %v857, %v984
        %vm1031 = vcmp.eq.s32.totalorder %v858, %v983
        %vm1032 = vcmp.eq.s32.totalorder %v858, %v984
        %vm1033 = vcmp.eq.s32.totalorder %v859, %v983
        %vm1034 = vcmp.eq.s32.totalorder %v859, %v984
        %vm1035 = vcmp.eq.s32.totalorder %v860, %v983
        %vm1036 = vcmp.eq.s32.totalorder %v860, %v984
        %v1037 = vsel %vm1005, 1, 0
        %v1038 = vsel %vm1006, 1, 0
        %v1039 = vsel %vm1007, 1, 0
        %v1040 = vsel %vm1008, 1, 0
        %v1041 = vsel %vm1009, 1, 0
        %v1042 = vsel %vm1010, 1, 0
        %v1043 = vsel %vm1011, 1, 0
        %v1044 = vsel %vm1012, 1, 0
        %v1045 = vsel %vm1013, 1, 0
        %v1046 = vsel %vm1014, 1, 0
        %v1047 = vsel %vm1015, 1, 0
        %v1048 = vsel %vm1016, 1, 0
        %v1049 = vsel %vm1017, 1, 0
        %v1050 = vsel %vm1018, 1, 0
        %v1051 = vsel %vm1019, 1, 0
        %v1052 = vsel %vm1020, 1, 0
        %v1053 = vsel %vm1021, 1, 0
        %v1054 = vsel %vm1022, 1, 0
        %v1055 = vsel %vm1023, 1, 0
        %v1056 = vsel %vm1024, 1, 0
        %v1057 = vsel %vm1025, 1, 0
        %v1058 = vsel %vm1026, 1, 0
        %v1059 = vsel %vm1027, 1, 0
        %v1060 = vsel %vm1028, 1, 0
        %v1061 = vsel %vm1029, 1, 0
        %v1062 = vsel %vm1030, 1, 0
        %v1063 = vsel %vm1031, 1, 0
        %v1064 = vsel %vm1032, 1, 0
        %v1065 = vsel %vm1033, 1, 0
        %v1066 = vsel %vm1034, 1, 0
        %v1067 = vsel %vm1035, 1, 0
        %v1068 = vsel %vm1036, 1, 0
        %v1069 = vcvt.s32.f32 %v1037
        %v1070 = vcvt.s32.f32 %v1038
        %v1071 = vcvt.s32.f32 %v1039
        %v1072 = vcvt.s32.f32 %v1040
        %v1073 = vcvt.s32.f32 %v1041
        %v1074 = vcvt.s32.f32 %v1042
        %v1075 = vcvt.s32.f32 %v1043
        %v1076 = vcvt.s32.f32 %v1044
        %v1077 = vcvt.s32.f32 %v1045
        %v1078 = vcvt.s32.f32 %v1046
        %v1079 = vcvt.s32.f32 %v1047
        %v1080 = vcvt.s32.f32 %v1048
        %v1081 = vcvt.s32.f32 %v1049
        %v1082 = vcvt.s32.f32 %v1050
        %v1083 = vcvt.s32.f32 %v1051
        %v1084 = vcvt.s32.f32 %v1052
        %v1085 = vcvt.s32.f32 %v1053
        %v1086 = vcvt.s32.f32 %v1054
        %v1087 = vcvt.s32.f32 %v1055
        %v1088 = vcvt.s32.f32 %v1056
        %v1089 = vcvt.s32.f32 %v1057
        %v1090 = vcvt.s32.f32 %v1058
        %v1091 = vcvt.s32.f32 %v1059
        %v1092 = vcvt.s32.f32 %v1060
        %v1093 = vcvt.s32.f32 %v1061
        %v1094 = vcvt.s32.f32 %v1062
        %v1095 = vcvt.s32.f32 %v1063
        %v1096 = vcvt.s32.f32 %v1064
        %v1097 = vcvt.s32.f32 %v1065
        %v1098 = vcvt.s32.f32 %v1066
        %v1099 = vcvt.s32.f32 %v1067
        %v1100 = vcvt.s32.f32 %v1068
        %v1101 = vld [vmem:[%s2] sm:$0xff]
        %v1102 = vld [vmem:[%s2 + $0x8] sm:$0xff]
        %v1103 = vld [vmem:[%s2 + $0x10] sm:$0xff]
        %v1104 = vld [vmem:[%s2 + $0x18] sm:$0xff]
        %1105 = vmatprep.subr.mxu0 %v1070
        %1106 = vmatpush1.msra.mxu0 %v1069
        %1107 = vmatprep.subr.mxu0 %v1072
        %1108 = vmatpush1.msra.mxu0 %v1071
        %1109 = vmatprep.subr.mxu0 %v1074
        %1110 = vmatpush1.msra.mxu0 %v1073
        %1111 = vmatprep.subr.mxu0 %v1076
        %1112 = vmatpush1.msra.mxu0 %v1075
        %1113 = vmatprep.subr.mxu0 %v1078
        %1114 = vmatpush1.msra.mxu0 %v1077
        %1115 = vmatprep.subr.mxu0 %v1080
        %1116 = vmatpush1.msra.mxu0 %v1079
        %1117 = vmatprep.subr.mxu0 %v1082
        %1118 = vmatpush1.msra.mxu0 %v1081
        %1119 = vmatprep.subr.mxu0 %v1084
        %1120 = vmatpush1.msra.mxu0 %v1083
        %1121 = vmatprep.subr.mxu0 %v1086
        %1122 = vmatpush1.msra.mxu0 %v1085
        %1123 = vmatprep.subr.mxu0 %v1088
        %1124 = vmatpush1.msra.mxu0 %v1087
        %1125 = vmatprep.subr.mxu0 %v1090
        %1126 = vmatpush1.msra.mxu0 %v1089
        %1127 = vmatprep.subr.mxu0 %v1092
        %1128 = vmatpush1.msra.mxu0 %v1091
        %1129 = vmatprep.subr.mxu0 %v1094
        %1130 = vmatpush1.msra.mxu0 %v1093
        %1131 = vmatprep.subr.mxu0 %v1096
        %1132 = vmatpush1.msra.mxu0 %v1095
        %1133 = vmatprep.subr.mxu0 %v1098
        %1134 = vmatpush1.msra.mxu0 %v1097
        %1135 = vmatprep.subr.mxu0 %v1100
        %1136 = vmatpush1.msra.mxu0 %v1099
        %1137 = vmatprep.subr.mxu0 0.0
        %1138 = vmatpush1.msra.mxu0 0.0
        %1139 = vmatprep.subr.mxu0 0.0
        %1140 = vmatpush1.msra.mxu0 0.0
        %1141 = vmatprep.subr.mxu0 0.0
        %1142 = vmatpush1.msra.mxu0 0.0
        %1143 = vmatprep.subr.mxu0 0.0
        %1144 = vmatpush1.msra.mxu0 0.0
        %1145 = vmatprep.subr.mxu0 0.0
        %1146 = vmatpush1.msra.mxu0 0.0
        %1147 = vmatprep.subr.mxu0 0.0
        %1148 = vmatpush1.msra.mxu0 0.0
        %1149 = vmatprep.subr.mxu0 0.0
        %1150 = vmatpush1.msra.mxu0 0.0
        %1151 = vmatprep.subr.mxu0 0.0
        %1152 = vmatpush1.msra.mxu0 0.0
        %1153 = vmatprep.subr.mxu0 0.0
        %1154 = vmatpush1.msra.mxu0 0.0
        %1155 = vmatprep.subr.mxu0 0.0
        %1156 = vmatpush1.msra.mxu0 0.0
        %1157 = vmatprep.subr.mxu0 0.0
        %1158 = vmatpush1.msra.mxu0 0.0
        %1159 = vmatprep.subr.mxu0 0.0
        %1160 = vmatpush1.msra.mxu0 0.0
        %1161 = vmatprep.subr.mxu0 0.0
        %1162 = vmatpush1.msra.mxu0 0.0
        %1163 = vmatprep.subr.mxu0 0.0
        %1164 = vmatpush1.msra.mxu0 0.0
        %1165 = vmatprep.subr.mxu0 0.0
        %1166 = vmatpush1.msra.mxu0 0.0
        %1167 = vmatprep.subr.mxu0 0.0
        %1168 = vmatpush1.msra.mxu0 0.0
        %1169 = vmatprep.mubr.f32.mxu0 0.0
        %1170 = vmatmul.mubr.f32.gmra.mrb[0].mxu0 %v1101
        %v1171 = vpop.f32.mrb[0].mxu0
        %v1172 = vadd.f32 0.0, %v1171
        %v1173 = vpop.f32.mrb[0].mxu0
        %v1174 = vadd.f32 0.0, %v1173
        %1175 = vmatprep.mubr.f32.mxu0 0.0
        %1176 = vmatmul.mubr.f32.gmra.mrb[0].mxu0 %v1102
        %v1177 = vpop.f32.mrb[0].mxu0
        %v1178 = vadd.f32 0.0, %v1177
        %v1179 = vpop.f32.mrb[0].mxu0
        %v1180 = vadd.f32 0.0, %v1179
        %1181 = vmatprep.mubr.f32.mxu0 0.0
        %1182 = vmatmul.mubr.f32.gmra.mrb[0].mxu0 %v1103
        %v1183 = vpop.f32.mrb[0].mxu0
        %v1184 = vadd.f32 0.0, %v1183
        %v1185 = vpop.f32.mrb[0].mxu0
        %v1186 = vadd.f32 0.0, %v1185
        %1187 = vmatprep.mubr.f32.mxu0 0.0
        %1188 = vmatmul.mubr.f32.gmra.mrb[0].mxu0 %v1104
        %v1189 = vpop.f32.mrb[0].mxu0
        %v1190 = vadd.f32 0.0, %v1189
        %v1191 = vpop.f32.mrb[0].mxu0
        %v1192 = vadd.f32 0.0, %v1191
        %1193 = vdwg.mxu0
        %1194 = vst [vmem:[%s354] sm:$0xff] %v1172
        %1195 = vst [vmem:[%s354 + $0x8] sm:$0xff] %v1174
        %1196 = vst [vmem:[%s354 + $0x10] sm:$0xff] %v1178
        %1197 = vst [vmem:[%s354 + $0x18] sm:$0xff] %v1180
        %1198 = vst [vmem:[%s354 + $0x20] sm:$0xff] %v1184
        %1199 = vst [vmem:[%s354 + $0x28] sm:$0xff] %v1186
        %1200 = vst [vmem:[%s354 + $0x30] sm:$0xff] %v1190
        %1201 = vst [vmem:[%s354 + $0x38] sm:$0xff] %v1192
        %s1202 = smul.u32 %s25, 256
        %v1203 = vlaneseq
        %v1204 = vand.u32 %v1203, 127
        %v1205 = vadd.s32 %v1204, 128
        %v1206 = vstv %s1202
        %v1207 = vadd.s32 %v1206, %v1204
        %v1208 = vadd.s32 %v1206, %v1205
        %vm1209 = vcmp.lt.s32.totalorder %v1207, 300
        %vm1210 = vcmp.lt.s32.totalorder %v1208, 300
        %v1211 = vsel %vm1209, 1, 0
        %v1212 = vsel %vm1210, 1, 0
        %v1213 = vcvt.s32.f32 %v1211
        %v1214 = vcvt.s32.f32 %v1212
        %v1215 = vld [vmem:[%s399] sm:$0xff]
        %v1216 = vld [vmem:[%s399 + $0x8] sm:$0xff]
        %v1217 = vld [vmem:[%s399 + $0x10] sm:$0xff]
        %v1218 = vld [vmem:[%s399 + $0x18] sm:$0xff]
        %v1219 = vld [vmem:[%s399 + $0x20] sm:$0xff]
        %v1220 = vld [vmem:[%s399 + $0x28] sm:$0xff]
        %v1221 = vld [vmem:[%s399 + $0x30] sm:$0xff]
        %v1222 = vld [vmem:[%s399 + $0x38] sm:$0xff]
        %v1223 = vld [vmem:[%s399 + $0x40] sm:$0xff]
        %v1224 = vld [vmem:[%s399 + $0x48] sm:$0xff]
        %v1225 = vld [vmem:[%s399 + $0x50] sm:$0xff]
        %v1226 = vld [vmem:[%s399 + $0x58] sm:$0xff]
        %v1227 = vld [vmem:[%s399 + $0x60] sm:$0xff]
        %v1228 = vld [vmem:[%s399 + $0x68] sm:$0xff]
        %v1229 = vld [vmem:[%s399 + $0x70] sm:$0xff]
        %v1230 = vld [vmem:[%s399 + $0x78] sm:$0xff]
        %v1231 = vmul.f32 %v1069, %v1213
        %v1232 = vmul.f32 %v1070, %v1214
        %v1233 = vmul.f32 %v1071, %v1213
        %v1234 = vmul.f32 %v1072, %v1214
        %v1235 = vmul.f32 %v1073, %v1213
        %v1236 = vmul.f32 %v1074, %v1214
        %v1237 = vmul.f32 %v1075, %v1213
        %v1238 = vmul.f32 %v1076, %v1214
        %v1239 = vmul.f32 %v1077, %v1213
        %v1240 = vmul.f32 %v1078, %v1214
        %v1241 = vmul.f32 %v1079, %v1213
        %v1242 = vmul.f32 %v1080, %v1214
        %v1243 = vmul.f32 %v1081, %v1213
        %v1244 = vmul.f32 %v1082, %v1214
        %v1245 = vmul.f32 %v1083, %v1213
        %v1246 = vmul.f32 %v1084, %v1214
        %v1247 = vmul.f32 %v1085, %v1213
        %v1248 = vmul.f32 %v1086, %v1214
        %v1249 = vmul.f32 %v1087, %v1213
        %v1250 = vmul.f32 %v1088, %v1214
        %v1251 = vmul.f32 %v1089, %v1213
        %v1252 = vmul.f32 %v1090, %v1214
        %v1253 = vmul.f32 %v1091, %v1213
        %v1254 = vmul.f32 %v1092, %v1214
        %v1255 = vmul.f32 %v1093, %v1213
        %v1256 = vmul.f32 %v1094, %v1214
        %v1257 = vmul.f32 %v1095, %v1213
        %v1258 = vmul.f32 %v1096, %v1214
        %v1259 = vmul.f32 %v1097, %v1213
        %v1260 = vmul.f32 %v1098, %v1214
        %v1261 = vmul.f32 %v1099, %v1213
        %v1262 = vmul.f32 %v1100, %v1214
        %v1263 = vadd.f32 %v1231, %v1232
        %1264 = vadd.xlane.f32.xlu0 %v1263
        %v1265 = vpop.xlane.xlu0 %1264
        %v1266 = vadd.f32 %v1233, %v1234
        %1267 = vadd.xlane.f32.xlu0 %v1266
        %v1268 = vpop.xlane.xlu0 %1267
        %v1269 = vadd.f32 %v1235, %v1236
        %1270 = vadd.xlane.f32.xlu0 %v1269
        %v1271 = vpop.xlane.xlu0 %1270
        %v1272 = vadd.f32 %v1237, %v1238
        %1273 = vadd.xlane.f32.xlu0 %v1272
        %v1274 = vpop.xlane.xlu0 %1273
        %v1275 = vadd.f32 %v1239, %v1240
        %1276 = vadd.xlane.f32.xlu0 %v1275
        %v1277 = vpop.xlane.xlu0 %1276
        %v1278 = vadd.f32 %v1241, %v1242
        %1279 = vadd.xlane.f32.xlu0 %v1278
        %v1280 = vpop.xlane.xlu0 %1279
        %v1281 = vadd.f32 %v1243, %v1244
        %1282 = vadd.xlane.f32.xlu0 %v1281
        %v1283 = vpop.xlane.xlu0 %1282
        %v1284 = vadd.f32 %v1245, %v1246
        %1285 = vadd.xlane.f32.xlu0 %v1284
        %v1286 = vpop.xlane.xlu0 %1285
        %v1287 = vadd.f32 %v1247, %v1248
        %1288 = vadd.xlane.f32.xlu0 %v1287
        %v1289 = vpop.xlane.xlu0 %1288
        %v1290 = vadd.f32 %v1249, %v1250
        %1291 = vadd.xlane.f32.xlu0 %v1290
        %v1292 = vpop.xlane.xlu0 %1291
        %v1293 = vadd.f32 %v1251, %v1252
        %1294 = vadd.xlane.f32.xlu0 %v1293
        %v1295 = vpop.xlane.xlu0 %1294
        %v1296 = vadd.f32 %v1253, %v1254
        %1297 = vadd.xlane.f32.xlu0 %v1296
        %v1298 = vpop.xlane.xlu0 %1297
        %v1299 = vadd.f32 %v1255, %v1256
        %1300 = vadd.xlane.f32.xlu0 %v1299
        %v1301 = vpop.xlane.xlu0 %1300
        %v1302 = vadd.f32 %v1257, %v1258
        %1303 = vadd.xlane.f32.xlu0 %v1302
        %v1304 = vpop.xlane.xlu0 %1303
        %v1305 = vadd.f32 %v1259, %v1260
        %1306 = vadd.xlane.f32.xlu0 %v1305
        %v1307 = vpop.xlane.xlu0 %1306
        %v1308 = vadd.f32 %v1261, %v1262
        %1309 = vadd.xlane.f32.xlu0 %v1308
        %v1310 = vpop.xlane.xlu0 %1309
        %v1311 = vadd.f32 %v1215, %v1265
        %v1312 = vadd.f32 %v1216, %v1268
        %v1313 = vadd.f32 %v1217, %v1271
        %v1314 = vadd.f32 %v1218, %v1274
        %v1315 = vadd.f32 %v1219, %v1277
        %v1316 = vadd.f32 %v1220, %v1280
        %v1317 = vadd.f32 %v1221, %v1283
        %v1318 = vadd.f32 %v1222, %v1286
        %v1319 = vadd.f32 %v1223, %v1289
        %v1320 = vadd.f32 %v1224, %v1292
        %v1321 = vadd.f32 %v1225, %v1295
        %v1322 = vadd.f32 %v1226, %v1298
        %v1323 = vadd.f32 %v1227, %v1301
        %v1324 = vadd.f32 %v1228, %v1304
        %v1325 = vadd.f32 %v1229, %v1307
        %v1326 = vadd.f32 %v1230, %v1310
        %vm1327 = vcmask 7168
        %1328 = vst.msk [vmem:[%s399] sm:$0xff] %vm1327, %v1311
        %1329 = vst.msk [vmem:[%s399 + $0x8] sm:$0xff] %vm1327, %v1312
        %1330 = vst.msk [vmem:[%s399 + $0x10] sm:$0xff] %vm1327, %v1313
        %1331 = vst.msk [vmem:[%s399 + $0x18] sm:$0xff] %vm1327, %v1314
        %1332 = vst.msk [vmem:[%s399 + $0x20] sm:$0xff] %vm1327, %v1315
        %1333 = vst.msk [vmem:[%s399 + $0x28] sm:$0xff] %vm1327, %v1316
        %1334 = vst.msk [vmem:[%s399 + $0x30] sm:$0xff] %vm1327, %v1317
        %1335 = vst.msk [vmem:[%s399 + $0x38] sm:$0xff] %vm1327, %v1318
        %1336 = vst.msk [vmem:[%s399 + $0x40] sm:$0xff] %vm1327, %v1319
        %1337 = vst.msk [vmem:[%s399 + $0x48] sm:$0xff] %vm1327, %v1320
        %1338 = vst.msk [vmem:[%s399 + $0x50] sm:$0xff] %vm1327, %v1321
        %1339 = vst.msk [vmem:[%s399 + $0x58] sm:$0xff] %vm1327, %v1322
        %1340 = vst.msk [vmem:[%s399 + $0x60] sm:$0xff] %vm1327, %v1323
        %1341 = vst.msk [vmem:[%s399 + $0x68] sm:$0xff] %vm1327, %v1324
        %1342 = vst.msk [vmem:[%s399 + $0x70] sm:$0xff] %vm1327, %v1325
        %1343 = vst.msk [vmem:[%s399 + $0x78] sm:$0xff] %vm1327, %v1326
        %v1344 = vsub.f32 %v436, %v1172
        %v1345 = vsub.f32 %v437, %v1174
        %v1346 = vsub.f32 %v438, %v1178
        %v1347 = vsub.f32 %v439, %v1180
        %v1348 = vsub.f32 %v440, %v1184
        %v1349 = vsub.f32 %v441, %v1186
        %v1350 = vsub.f32 %v442, %v1190
        %v1351 = vsub.f32 %v443, %v1192
        %v1352 = vmul.f32 %v1344, %v1344
        %v1353 = vmul.f32 %v1345, %v1345
        %v1354 = vmul.f32 %v1346, %v1346
        %v1355 = vmul.f32 %v1347, %v1347
        %v1356 = vmul.f32 %v1348, %v1348
        %v1357 = vmul.f32 %v1349, %v1349
        %v1358 = vmul.f32 %v1350, %v1350
        %v1359 = vmul.f32 %v1351, %v1351
        %v1360 = vadd.f32 %v1352, %v1354
        %v1361 = vadd.f32 %v1360, %v1356
        %v1362 = vadd.f32 %v1361, %v1358
        %v1363 = vrot.slane %v1362, 4
        %v1364 = vadd.f32 %v1362, %v1363
        %v1365 = vrot.slane %v1364, 2
        %v1366 = vadd.f32 %v1364, %v1365
        %v1367 = vrot.slane %v1366, 1
        %v1368 = vadd.f32 %v1366, %v1367
        %v1369 = vadd.f32 %v1353, %v1355
        %v1370 = vadd.f32 %v1369, %v1357
        %v1371 = vadd.f32 %v1370, %v1359
        %v1372 = vrot.slane %v1371, 4
        %v1373 = vadd.f32 %v1371, %v1372
        %v1374 = vrot.slane %v1373, 2
        %v1375 = vadd.f32 %v1373, %v1374
        %v1376 = vrot.slane %v1375, 1
        %v1377 = vadd.f32 %v1375, %v1376
        %v1378 = vmul.f32 %v1368, 0.03125
        %v1379 = vmul.f32 %v1377, 0.03125
        %v1380 = vand.u32 2147483647, %v436
        %v1381 = vand.u32 2147483647, %v437
        %v1382 = vand.u32 2147483647, %v438
        %v1383 = vand.u32 2147483647, %v439
        %v1384 = vand.u32 2147483647, %v440
        %v1385 = vand.u32 2147483647, %v441
        %v1386 = vand.u32 2147483647, %v442
        %v1387 = vand.u32 2147483647, %v443
        %v1388 = vadd.f32 %v1380, %v1382
        %v1389 = vadd.f32 %v1388, %v1384
        %v1390 = vadd.f32 %v1389, %v1386
        %v1391 = vrot.slane %v1390, 4
        %v1392 = vadd.f32 %v1390, %v1391
        %v1393 = vrot.slane %v1392, 2
        %v1394 = vadd.f32 %v1392, %v1393
        %v1395 = vrot.slane %v1394, 1
        %v1396 = vadd.f32 %v1394, %v1395
        %v1397 = vadd.f32 %v1381, %v1383
        %v1398 = vadd.f32 %v1397, %v1385
        %v1399 = vadd.f32 %v1398, %v1387
        %v1400 = vrot.slane %v1399, 4
        %v1401 = vadd.f32 %v1399, %v1400
        %v1402 = vrot.slane %v1401, 2
        %v1403 = vadd.f32 %v1401, %v1402
        %v1404 = vrot.slane %v1403, 1
        %v1405 = vadd.f32 %v1403, %v1404
        %vm1406 = vcmp.gt.f32.partialorder %v1396, 0.0
        %vm1407 = vcmp.gt.f32.partialorder %v1405, 0.0
        %v1408 = vsel %vm1406, 1, 0
        %v1409 = vsel %vm1407, 1, 0
        %v1410 = vcvt.s32.f32 %v1408
        %v1411 = vcvt.s32.f32 %v1409
        %v1412 = vld [vmem:[%s403] sm:$0x3]
        %v1413 = vmul.f32 %v1378, %v1410
        %v1414 = vmul.f32 %v1379, %v1411
        %v1417 = vcombine.low %v1413, %v1414
        %v1419 = vunpack.c.l.s4 1966171168
        %v1420 = vunpack.c.0.s8 %v1419
        %v1421 = vlaneseq
        %v1422 = vshrl.u32 %v1421, 7
        %v1423 = vsub.s32 %v1420, %v1422
        %v1424 = vrot.slane %v1417, %v1423
        %v1426 = vunpack.c.l.s4 1966171168
        %v1427 = vunpack.c.0.s8 %v1426
        %v1428 = vlaneseq
        %v1429 = vshrl.u32 %v1428, 7
        %v1430 = vsub.s32 %v1427, %v1429
        %v1431 = vrot.slane %v1424, %v1430
        %v1433 = vadd.f32 %v1412, %v1431
        %1434 = vst.msk [vmem:[%s403] sm:$0x3] %vm1003, %v1433
        %v1435 = vld [vmem:[%s407] sm:$0x3]
        %v1438 = vcombine.low %v1410, %v1411
        %v1440 = vunpack.c.l.s4 1966171168
        %v1441 = vunpack.c.0.s8 %v1440
        %v1442 = vlaneseq
        %v1443 = vshrl.u32 %v1442, 7
        %v1444 = vsub.s32 %v1441, %v1443
        %v1445 = vrot.slane %v1438, %v1444
        %v1447 = vunpack.c.l.s4 1966171168
        %v1448 = vunpack.c.0.s8 %v1447
        %v1449 = vlaneseq
        %v1450 = vshrl.u32 %v1449, 7
        %v1451 = vsub.s32 %v1448, %v1450
        %v1452 = vrot.slane %v1445, %v1451
        %v1454 = vadd.f32 %v1435, %v1452
        %1455 = vst.msk [vmem:[%s407] sm:$0x3] %vm1003, %v1454
        %s1456 = sand.u32 %s133, 1
        %s1457 = sand.u32 %s133, 1
        %s1458 = smul.addr %s1457, 64
        %s1459 = scalar_lea.vmem [#allocation3], %s1458
        %s1460 = smul.u32 2, %s25
        %p1461 = scmp.lt.s32.totalorder %s24, 1
        %s1462 = scalar_select %p1461, %s24, 1
        %p1463 = scmp.lt.s32.totalorder %s1460, 3
        %s1464 = scalar_select %p1463, %s1460, 3
        %s1465 = smul.addr %s1462, 4
        %s1466 = sadd.s32 %s1464, %s1465
        %s1467 = scalar_lea.vmem %s5, %s1466
        %p1468 = scmp.lt.s32.totalorder %s24, 1
        %s1469 = scalar_select %p1468, %s24, 1
        %s1470 = smul.addr %s1469, 16
        %s1471 = smul.addr %s1470, 8
        %s1472 = scalar_lea.vmem %s6, %s1471
        %p1473 = scmp.lt.s32.totalorder %s24, 1
        %s1474 = scalar_select %p1473, %s24, 1
        %s1475 = smul.addr %s1474, 2
        %s1476 = scalar_lea.vmem %s7, %s1475
        %p1477 = scmp.lt.s32.totalorder %s24, 1
        %s1478 = scalar_select %p1477, %s24, 1
        %s1479 = smul.addr %s1478, 2
        %s1480 = scalar_lea.vmem %s8, %s1479
        // Predicated region
        $region64: #{vq_embedding_ema_forward.1} parent=54 // pred_check
          %p1481 = pneg %p143
        $region65: #{vq_embedding_ema_forward.1} parent=54 // pred_check_branch
          %1483 = sbr.rel (%p1481) target = $region67
        $region66: #{vq_embedding_ema_forward.1} parent=54 // pred_region
          %s1484 = smul.u32 2, %s25
          %s1485 = smul.addr %s24, 16
          %s1486 = sadd.s32 %s1484, %s1485
          %s1487 = smul.addr %s1486, 8
          %s1488 = scalar_lea.vmem %s4, %s1487
          // Predicated region
          $region68: #{vq_embedding_ema_forward.1} parent=66 // pred_check
            _
          $region69: #{vq_embedding_ema_forward.1} parent=66 // pred_check_branch
            %1490 = sbr.rel (0) target = $region71
          $region70: #{vq_embedding_ema_forward.1} parent=66 // pred_region
            // Predicated region
            $region72: #{vq_embedding_ema_forward.1} parent=70 // pred_check
              _
            $region73: #{vq_embedding_ema_forward.1} parent=70 // pred_check_branch
              %1492 = sbr.rel (0) target = $region75
            $region74: #{vq_embedding_ema_forward.1} parent=70 // pred_region
              loop: start=0, step=1, limit=1
              $region76: #{vq_embedding_ema_forward.1} parent=74 // loop_pre_header
                _
              $region77: #{vq_embedding_ema_forward.1} parent=74 // loop_header
                %s1494 = sphi 0, %s1498
                %p1495 = scmp.ge.s32.totalorder %s1494, 1
                %s1499 = sphi %s1459, %s1459
                %s1500 = sphi %s1488, %s1488
              $region78: #{vq_embedding_ema_forward.1} parent=74 // loop_header_branch
                %1497 = sbr.rel (%p1495) target = $region82
              $region79: #{vq_embedding_ema_forward.1} parent=74 // loop_body
                %v1501 = vld [vmem:[%s1499] sm:$0xff]
                %1502 = vst [vmem:[%s1500] sm:$0xff] %v1501
                %v1503 = vld [vmem:[%s1499 + $0x8] sm:$0xff]
                %1504 = vst [vmem:[%s1500 + $0x8] sm:$0xff] %v1503
                %v1505 = vld [vmem:[%s1499 + $0x10] sm:$0xff]
                %1506 = vst [vmem:[%s1500 + $0x20] sm:$0xff] %v1505
                %v1507 = vld [vmem:[%s1499 + $0x18] sm:$0xff]
                %1508 = vst [vmem:[%s1500 + $0x28] sm:$0xff] %v1507
                %v1509 = vld [vmem:[%s1499 + $0x20] sm:$0xff]
                %1510 = vst [vmem:[%s1500 + $0x40] sm:$0xff] %v1509
                %v1511 = vld [vmem:[%s1499 + $0x28] sm:$0xff]
                %1512 = vst [vmem:[%s1500 + $0x48] sm:$0xff] %v1511
                %v1513 = vld [vmem:[%s1499 + $0x30] sm:$0xff]
                %1514 = vst [vmem:[%s1500 + $0x60] sm:$0xff] %v1513
                %v1515 = vld [vmem:[%s1499 + $0x38] sm:$0xff]
                %1516 = vst [vmem:[%s1500 + $0x68] sm:$0xff] %v1515
              $region80: #{vq_embedding_ema_forward.1} parent=74 // loop_footer
                %s1498 = sadd.s32 1, %s1494
              $region81: #{vq_embedding_ema_forward.1} parent=74 // loop_footer_branch
                %1493 = sbr.rel target = $region77
              $region82: #{vq_embedding_ema_forward.1} parent=74 // loop_exit
                _
            $region75: #{vq_embedding_ema_forward.1} parent=70 // pred_fallthru
              _
            // Predicated region
            $region83: #{vq_embedding_ema_forward.1} parent=70 // pred_check
              _
            $region84: #{vq_embedding_ema_forward.1} parent=70 // pred_check_branch
              %1518 = sbr.rel target = $region86
            $region85: #{vq_embedding_ema_forward.1} parent=70 // pred_region
              _
            $region86: #{vq_embedding_ema_forward.1} parent=70 // pred_fallthru
              _
          $region71: #{vq_embedding_ema_forward.1} parent=66 // pred_fallthru
            _
          %1519 = vnop
        $region67: #{vq_embedding_ema_forward.1} parent=54 // pred_fallthru
          _
        // Predicated region
        $region87: #{vq_embedding_ema_forward.1} parent=54 // pred_check
          %p1520 = pneg %p171
        $region88: #{vq_embedding_ema_forward.1} parent=54 // pred_check_branch
          %1522 = sbr.rel (%p1520) target = $region90
        $region89: #{vq_embedding_ema_forward.1} parent=54 // pred_region
          %s1523 = smul.u32 2, %s25
        $region90: #{vq_embedding_ema_forward.1} parent=54 // pred_fallthru
          _
        // Predicated region
        $region91: #{vq_embedding_ema_forward.1} parent=54 // pred_check
          %p1524 = pneg %p197
        $region92: #{vq_embedding_ema_forward.1} parent=54 // pred_check_branch
          %1526 = sbr.rel (%p1524) target = $region94
        $region93: #{vq_embedding_ema_forward.1} parent=54 // pred_region
          _
        $region94: #{vq_embedding_ema_forward.1} parent=54 // pred_fallthru
          _
        // Predicated region
        $region95: #{vq_embedding_ema_forward.1} parent=54 // pred_check
          %p1527 = pneg %p223
        $region96: #{vq_embedding_ema_forward.1} parent=54 // pred_check_branch
          %1529 = sbr.rel (%p1527) target = $region98
        $region97: #{vq_embedding_ema_forward.1} parent=54 // pred_region
          _
        $region98: #{vq_embedding_ema_forward.1} parent=54 // pred_fallthru
          _
        // Predicated region
        $region99: #{vq_embedding_ema_forward.1} parent=54 // pred_check
          %p1530 = pneg %p249
        $region100: #{vq_embedding_ema_forward.1} parent=54 // pred_check_branch
          %1532 = sbr.rel (%p1530) target = $region102
        $region101: #{vq_embedding_ema_forward.1} parent=54 // pred_region
          _
        $region102: #{vq_embedding_ema_forward.1} parent=54 // pred_fallthru
          _
      $region55: #{vq_embedding_ema_forward.1} parent=5 // pred_fallthru
        _
      %p1533 = scmp.le.s32.totalorder 2, %s15
      // Predicated region
      $region103: #{vq_embedding_ema_forward.1} parent=5 // pred_check
        %p1534 = pneg %p1533
      $region104: #{vq_embedding_ema_forward.1} parent=5 // pred_check_branch
        %1536 = sbr.rel (%p1534) target = $region106
      $region105: #{vq_embedding_ema_forward.1} parent=5 // pred_region
        %s1537 = ssub.s32 %s15, 2
        // Predicated region
        $region107: #{vq_embedding_ema_forward.1} parent=105 // pred_check
          %p1538 = pneg %p149
        $region108: #{vq_embedding_ema_forward.1} parent=105 // pred_check_branch
          %1540 = sbr.rel (%p1538) target = $region110
        $region109: #{vq_embedding_ema_forward.1} parent=105 // pred_region
          %s1541 = sand.u32 %s134, 1
          %s1542 = sand.u32 %s134, 1
          %s1543 = smul.addr %s1542, 64
          %s1544 = scalar_lea.vmem [#allocation3], %s1543
        $region110: #{vq_embedding_ema_forward.1} parent=105 // pred_fallthru
          _
        // Predicated region
        $region111: #{vq_embedding_ema_forward.1} parent=105 // pred_check
          %p1545 = pneg %p177
        $region112: #{vq_embedding_ema_forward.1} parent=105 // pred_check_branch
          %1547 = sbr.rel (%p1545) target = $region114
        $region113: #{vq_embedding_ema_forward.1} parent=105 // pred_region
          %s1548 = smul.u32 2, %s27
          %p1549 = scmp.lt.s32.totalorder %s26, 1
          %s1550 = scalar_select %p1549, %s26, 1
          %p1551 = scmp.lt.s32.totalorder %s1548, 3
          %s1552 = scalar_select %p1551, %s1548, 3
          %s1553 = smul.addr %s1550, 4
          %s1554 = sadd.s32 %s1552, %s1553
          %s1555 = scalar_lea.vmem %s5, %s1554
        $region114: #{vq_embedding_ema_forward.1} parent=105 // pred_fallthru
          _
        // Predicated region
        $region115: #{vq_embedding_ema_forward.1} parent=105 // pred_check
          %p1556 = pneg %p203
        $region116: #{vq_embedding_ema_forward.1} parent=105 // pred_check_branch
          %1558 = sbr.rel (%p1556) target = $region118
        $region117: #{vq_embedding_ema_forward.1} parent=105 // pred_region
          %p1559 = scmp.lt.s32.totalorder %s26, 1
          %s1560 = scalar_select %p1559, %s26, 1
          %s1561 = smul.addr %s1560, 16
          %s1562 = smul.addr %s1561, 8
          %s1563 = scalar_lea.vmem %s6, %s1562
        $region118: #{vq_embedding_ema_forward.1} parent=105 // pred_fallthru
          _
        // Predicated region
        $region119: #{vq_embedding_ema_forward.1} parent=105 // pred_check
          %p1564 = pneg %p229
        $region120: #{vq_embedding_ema_forward.1} parent=105 // pred_check_branch
          %1566 = sbr.rel (%p1564) target = $region122
        $region121: #{vq_embedding_ema_forward.1} parent=105 // pred_region
          %p1567 = scmp.lt.s32.totalorder %s26, 1
          %s1568 = scalar_select %p1567, %s26, 1
          %s1569 = smul.addr %s1568, 2
          %s1570 = scalar_lea.vmem %s7, %s1569
        $region122: #{vq_embedding_ema_forward.1} parent=105 // pred_fallthru
          _
        // Predicated region
        $region123: #{vq_embedding_ema_forward.1} parent=105 // pred_check
          %p1571 = pneg %p255
        $region124: #{vq_embedding_ema_forward.1} parent=105 // pred_check_branch
          %1573 = sbr.rel (%p1571) target = $region126
        $region125: #{vq_embedding_ema_forward.1} parent=105 // pred_region
          %p1574 = scmp.lt.s32.totalorder %s26, 1
          %s1575 = scalar_select %p1574, %s26, 1
          %s1576 = smul.addr %s1575, 2
          %s1577 = scalar_lea.vmem %s8, %s1576
        $region126: #{vq_embedding_ema_forward.1} parent=105 // pred_fallthru
          _
      $region106: #{vq_embedding_ema_forward.1} parent=5 // pred_fallthru
        _
    $region6: #{vq_embedding_ema_forward.1} parent=1 // loop_footer
      %s19 = sadd.s32 1, %s15
    $region7: #{vq_embedding_ema_forward.1} parent=1 // loop_footer_branch
      %14 = sbr.rel target = $region3
    $region8: #{vq_embedding_ema_forward.1} parent=1 // loop_exit
      _

</llo_original>
